<compile_context>
chip_gen: v7x
topology: tpu7x:2x2x1
jax: 0.10.0
libtpu: 0.0.40
codegen_flags: <defaults>
</compile_context>

<pallas_src>
import functools

import jax
import jax.numpy as jnp
from jax.experimental import pallas as pl
from jax.experimental.pallas import tpu as pltpu


def _round_up(x, m):
    return ((x + m - 1) // m) * m


def _make_kernel(num_layers):
    """Build the fused multi-layer hypergraph-convolution kernel."""

    def kernel(emb_ref, a_ref, out_ref, buf, acc, kacc):
        # grid = (layer l, row-block i, col-block k); all sequential.
        #   buf : (2, N_pad, D_pad) bf16  ping-pong layer carry (x_l / x_{l+1})
        #   acc : (N_pad, D_pad)    f32   running sum over layers
        #   kacc: (tm, D_pad)       f32   per-row-block K-reduction accumulator
        l = pl.program_id(0)
        i = pl.program_id(1)
        k = pl.program_id(2)
        nk = pl.num_programs(2)

        tm, tk = a_ref.shape

        row = pl.multiple_of(i * tm, 128)
        col = pl.multiple_of(k * tk, 128)

        rd = l % 2        # carry buffer holding x_l
        wr = 1 - rd       # carry buffer receiving x_{l+1}

        # Layer-0 seeding, done incrementally per column block while i == 0:
        # x_0 = embedding (bf16 carry) and the exact f32 layer-0 term of acc.
        @pl.when(jnp.logical_and(l == 0, i == 0))
        def _():
            e = emb_ref[...]                                  # (tk, D_pad) f32
            buf[0, pl.ds(col, tk), :] = e.astype(jnp.bfloat16)
            acc[pl.ds(col, tk), :] = e

        # MXU: bf16 x bf16 -> f32 accumulate.
        contrib = jnp.dot(
            a_ref[...],
            buf[rd, pl.ds(col, tk), :],
            preferred_element_type=jnp.float32,
        )

        @pl.when(k == 0)
        def _():
            kacc[...] = contrib            # overwrite: no zero-fill pass

        @pl.when(k != 0)
        def _():
            kacc[...] += contrib

        # End of the K reduction for this row block: fold x_{l+1} into the
        # running sum and stage it (bf16) as the next layer's carry.
        @pl.when(k == nk - 1)
        def _():
            new_x = kacc[...]
            acc[pl.ds(row, tm), :] = acc[pl.ds(row, tm), :] + new_x
            buf[wr, pl.ds(row, tm), :] = new_x.astype(jnp.bfloat16)

        # Emit the output tile only at the final layer (the out index_map pins
        # the block until then, so earlier layers cause no HBM writeback).
        @pl.when(jnp.logical_and(k == nk - 1, l == num_layers - 1))
        def _():
            out_ref[...] = acc[pl.ds(row, tm), :].astype(out_ref.dtype)

    return kernel


@functools.partial(jax.jit, static_argnames=("layers",))
def hyperconv_forward(adjacency, embedding, *, layers):
    """Pallas HyperConv forward: sum_{l=0}^{layers} A^l @ embedding."""
    n, d = embedding.shape
    emb_f32 = embedding.astype(jnp.float32)
    if layers == 0:
        return emb_f32

    d_pad = _round_up(d, 128)

    def footprint(n_pad, tm, tk):
        return (2 * n_pad * d_pad * 2      # bf16 ping-pong carry
                + n_pad * d_pad * 4        # f32 running sum
                + tm * d_pad * 4           # f32 K accumulator
                + 2 * tm * tk * 2          # adjacency tile double-buffer (bf16)
                + 2 * tk * d_pad * 4       # embedding tile double-buffer (f32)
                + 2 * tm * d_pad * 4)      # output tile double-buffer (f32)

    # Tile selection: keep the whole padded adjacency VMEM-resident when it
    # fits (single constant-index block -> DMA'd exactly once across layers);
    # otherwise stream 512x1024 (1 MiB) bf16 tiles.  No tile-shrink fallback.
    n_small = _round_up(n, 128)
    if footprint(n_small, n_small, n_small) <= (40 << 20):
        n_pad, tm, tk = n_small, n_small, n_small
    else:
        n_pad = _round_up(n, 1024)
        tm, tk = 512, 1024

    fp = footprint(n_pad, tm, tk)
    vmem_budget = 60 << 20     # conservative: also fits v7x's 64 MiB / core
    assert fp + (4 << 20) <= vmem_budget, (
        f"HyperConv VMEM footprint {fp / 2**20:.1f} MiB exceeds the "
        f"{vmem_budget / 2**20:.0f} MiB budget; shrink N or emb_size")
    vmem_limit = int(min(vmem_budget, max(32 << 20, fp + (8 << 20))))

    a_bf16 = adjacency.astype(jnp.bfloat16)
    emb = emb_f32
    if n_pad != n:
        a_bf16 = jnp.pad(a_bf16, ((0, n_pad - n), (0, n_pad - n)))
    if (n_pad != n) or (d_pad != d):
        emb = jnp.pad(emb, ((0, n_pad - n), (0, d_pad - d)))

    ni, nk = n_pad // tm, n_pad // tk

    def emb_index_map(l, i, k):
        # Only fetched while seeding (l==0, i==0); pinned to block 0 afterwards
        # so the embedding is DMA'd (essentially) once, not per grid step.
        first = jnp.logical_and(l == 0, i == 0)
        return jnp.where(first, k, 0), 0

    def out_index_map(l, i, k):
        # Pin the output block until the final layer -> single HBM writeback
        # per row block instead of one per layer.
        return jnp.where(l == layers - 1, i, 0), 0

    out = pl.pallas_call(
        _make_kernel(layers),
        out_shape=jax.ShapeDtypeStruct((n_pad, d_pad), jnp.float32),
        grid_spec=pltpu.PrefetchScalarGridSpec(
            num_scalar_prefetch=0,
            grid=(layers, ni, nk),
            in_specs=[
                # Embedding: tiled by column block, fetched only during seeding.
                pl.BlockSpec((tk, d_pad), emb_index_map),
                # Adjacency: streamed (or VMEM-resident if single-tile) bf16.
                pl.BlockSpec((tm, tk), lambda l, i, k: (i, k)),
            ],
            out_specs=pl.BlockSpec((tm, d_pad), out_index_map),
            scratch_shapes=[
                pltpu.VMEM((2, n_pad, d_pad), jnp.bfloat16),  # ping-pong carry
                pltpu.VMEM((n_pad, d_pad), jnp.float32),      # running sum
                pltpu.VMEM((tm, d_pad), jnp.float32),         # K accumulator
            ],
        ),
        # The layer axis carries the ping-pong buffers, the K axis carries the
        # per-row-block reduction -> everything must stay sequential.
        compiler_params=pltpu.CompilerParams(
            dimension_semantics=("arbitrary", "arbitrary", "arbitrary"),
            vmem_limit_bytes=vmem_limit,
        ),
    )(emb, a_bf16)

    return out[:n, :d]


def _reference(adjacency, embedding, layers):
    acc = embedding
    x = embedding
    for _ in range(layers):
        x = adjacency @ x
        acc = acc + x
    return acc


if __name__ == "__main__":
    # Small deterministic problem.  N and EMB are deliberately NOT multiples of
    # 128 to exercise the padding path (emb_size=100 matches the module default).
    N = 300
    EMB = 100
    LAYERS = 3

    key = jax.random.PRNGKey(0)
    k_adj, k_mask, k_emb = jax.random.split(key, 3)

    # Dense, sparse-ish, row-normalized adjacency (mimics the hypergraph
    # propagation matrix built from a scipy COO matrix in the original code).
    raw = jax.random.uniform(k_adj, (N, N), dtype=jnp.float32)
    mask = (jax.random.uniform(k_mask, (N, N)) < 0.1).astype(jnp.float32)
    adj = raw * mask
    row_sum = jnp.maximum(adj.sum(axis=1, keepdims=True), 1e-6)
    adjacency = adj / row_sum
    # TODO(synk): the 'Nowplaying' value<0.05 COO filtering branch is host-side
    # numpy sparse preprocessing; it has no in-kernel equivalent and is omitted.

    embedding = jax.random.normal(k_emb, (N, EMB), dtype=jnp.float32)

    out = hyperconv_forward(adjacency, embedding, layers=LAYERS)
    out = jax.block_until_ready(out)

    ref = _reference(adjacency, embedding, LAYERS)
    assert out.shape == (N, EMB)
    # bf16 adjacency / bf16 layer carry on the MXU (f32 accumulation) -> looser
    # tolerance than a pure-f32 pipeline.
    max_err = jnp.max(jnp.abs(out - ref))
    assert jnp.allclose(out, ref, atol=5e-2, rtol=5e-2), f"mismatch: {max_err}"

    print("KERNEL_OK")
</pallas_src>

<mosaic_0001>
module attributes {stable_mosaic.version = 11 : i64} {
  func.func @kernel(%arg0: i32, %arg1: i32, %arg2: i32, %arg3: memref<384x128xf32, #tpu.memory_space<vmem>>, %arg4: memref<384x384xbf16, #tpu.memory_space<vmem>>, %arg5: memref<384x128xf32, #tpu.memory_space<vmem>>, %arg6: memref<2x384x128xbf16, #tpu.memory_space<vmem>>, %arg7: memref<384x128xf32, #tpu.memory_space<vmem>>, %arg8: memref<384x128xf32, #tpu.memory_space<vmem>>) attributes {dimension_semantics = [#tpu.dimension_semantics<arbitrary>, #tpu.dimension_semantics<arbitrary>, #tpu.dimension_semantics<arbitrary>], iteration_bounds = array<i64: 3, 1, 1>, scalar_prefetch = 0 : i64, scratch_operands = 3 : i64, tpu.core_type = #tpu.core_type<tc>, window_params = [{transform_indices = @transform_0, window_bounds = array<i64: 384, 128>}, {transform_indices = @transform_1, window_bounds = array<i64: 384, 384>}, {transform_indices = @transform_2, window_bounds = array<i64: 384, 128>}]} {
    %c384_i32 = arith.constant 384 : i32
    %0 = arith.muli %arg1, %c384_i32 : i32
    %1 = tpu.assume_multiple %0, 128 : i32
    %c384_i32_0 = arith.constant 384 : i32
    %2 = arith.muli %arg2, %c384_i32_0 : i32
    %3 = tpu.assume_multiple %2, 128 : i32
    %c2_i32 = arith.constant 2 : i32
    %c0_i32 = arith.constant 0 : i32
    %4 = arith.cmpi eq, %c2_i32, %c0_i32 : i32
    %c1_i32 = arith.constant 1 : i32
    %5 = arith.select %4, %c1_i32, %c2_i32 : i32
    %6 = arith.remsi %arg0, %5 : i32
    %c0_i32_1 = arith.constant 0 : i32
    %7 = arith.cmpi ne, %6, %c0_i32_1 : i32
    %c0_i32_2 = arith.constant 0 : i32
    %8 = arith.cmpi slt, %6, %c0_i32_2 : i32
    %c0_i32_3 = arith.constant 0 : i32
    %9 = arith.cmpi slt, %5, %c0_i32_3 : i32
    %10 = arith.xori %8, %9 : i1
    %11 = arith.andi %10, %7 : i1
    %12 = arith.addi %6, %5 : i32
    %13 = arith.select %11, %12, %6 : i32
    %c1_i32_4 = arith.constant 1 : i32
    %14 = arith.subi %c1_i32_4, %13 : i32
    %c0_i32_5 = arith.constant 0 : i32
    %15 = arith.cmpi eq, %arg0, %c0_i32_5 : i32
    %c0_i32_6 = arith.constant 0 : i32
    %16 = arith.cmpi eq, %arg1, %c0_i32_6 : i32
    %17 = arith.andi %15, %16 : i1
    %18 = arith.extui %17 : i1 to i32
    %c0_i32_7 = arith.constant 0 : i32
    %19 = arith.cmpi ne, %18, %c0_i32_7 : i32
    scf.if %19 {
      %c0_19 = arith.constant 0 : index
      %c0_20 = arith.constant 0 : index
      %40 = vector.load %arg3[%c0_19, %c0_20] : memref<384x128xf32, #tpu.memory_space<vmem>>, vector<384x128xf32>
      %41 = arith.truncf %40 : vector<384x128xf32> to vector<384x128xbf16>
      %c0_21 = arith.constant 0 : index
      %42 = arith.index_cast %3 : i32 to index
      %c0_22 = arith.constant 0 : index
      %43 = vector.load %arg6[%c0_21, %42, %c0_22] : memref<2x384x128xbf16, #tpu.memory_space<vmem>>, vector<1x384x128xbf16>
      %44 = vector.shape_cast %43 : vector<1x384x128xbf16> to vector<384x128xbf16>
      %45 = vector.shape_cast %41 : vector<384x128xbf16> to vector<1x384x128xbf16>
      tpu.vector_store %arg6[%c0_21, %42, %c0_22], %45 {strides = array<i32>} : memref<2x384x128xbf16, #tpu.memory_space<vmem>>, vector<1x384x128xbf16>,
      %46 = arith.index_cast %3 : i32 to index
      %c0_23 = arith.constant 0 : index
      %47 = vector.load %arg7[%46, %c0_23] : memref<384x128xf32, #tpu.memory_space<vmem>>, vector<384x128xf32>
      tpu.vector_store %arg7[%46, %c0_23], %40 {strides = array<i32>} : memref<384x128xf32, #tpu.memory_space<vmem>>, vector<384x128xf32>,
    } else {
    }
    %c0 = arith.constant 0 : index
    %c0_8 = arith.constant 0 : index
    %20 = vector.load %arg4[%c0, %c0_8] : memref<384x384xbf16, #tpu.memory_space<vmem>>, vector<384x384xbf16>
    %21 = arith.index_cast %13 : i32 to index
    %22 = arith.index_cast %3 : i32 to index
    %c0_9 = arith.constant 0 : index
    %23 = vector.load %arg6[%21, %22, %c0_9] : memref<2x384x128xbf16, #tpu.memory_space<vmem>>, vector<1x384x128xbf16>
    %24 = vector.shape_cast %23 : vector<1x384x128xbf16> to vector<384x128xbf16>
    %cst = arith.constant dense<0.000000e+00> : vector<384x128xf32>
    %25 = tpu.matmul %20, %24, %cst {dimension_numbers = #tpu.dot_dimension_numbers<[1], [0], [0], [1], [0, 0, 1, 1], [], []>} : vector<384x384xbf16>, vector<384x128xbf16>, vector<384x128xf32> -> vector<384x128xf32>
    %c0_i32_10 = arith.constant 0 : i32
    %26 = arith.cmpi eq, %arg2, %c0_i32_10 : i32
    %27 = arith.extui %26 : i1 to i32
    %c0_i32_11 = arith.constant 0 : i32
    %28 = arith.cmpi ne, %27, %c0_i32_11 : i32
    scf.if %28 {
      %c0_19 = arith.constant 0 : index
      %c0_20 = arith.constant 0 : index
      %40 = vector.load %arg8[%c0_19, %c0_20] : memref<384x128xf32, #tpu.memory_space<vmem>>, vector<384x128xf32>
      tpu.vector_store %arg8[%c0_19, %c0_20], %25 {strides = array<i32>} : memref<384x128xf32, #tpu.memory_space<vmem>>, vector<384x128xf32>,
    } else {
    }
    %c0_i32_12 = arith.constant 0 : i32
    %29 = arith.cmpi ne, %arg2, %c0_i32_12 : i32
    %30 = arith.extui %29 : i1 to i32
    %c0_i32_13 = arith.constant 0 : i32
    %31 = arith.cmpi ne, %30, %c0_i32_13 : i32
    scf.if %31 {
      %c0_19 = arith.constant 0 : index
      %c0_20 = arith.constant 0 : index
      %40 = vector.load %arg8[%c0_19, %c0_20] : memref<384x128xf32, #tpu.memory_space<vmem>>, vector<384x128xf32>
      %41 = arith.addf %40, %25 : vector<384x128xf32>
      %c0_21 = arith.constant 0 : index
      %c0_22 = arith.constant 0 : index
      %42 = vector.load %arg8[%c0_21, %c0_22] : memref<384x128xf32, #tpu.memory_space<vmem>>, vector<384x128xf32>
      tpu.vector_store %arg8[%c0_21, %c0_22], %41 {strides = array<i32>} : memref<384x128xf32, #tpu.memory_space<vmem>>, vector<384x128xf32>,
    } else {
    }
    %c0_i32_14 = arith.constant 0 : i32
    %32 = arith.cmpi eq, %arg2, %c0_i32_14 : i32
    %33 = arith.extui %32 : i1 to i32
    %c0_i32_15 = arith.constant 0 : i32
    %34 = arith.cmpi ne, %33, %c0_i32_15 : i32
    scf.if %34 {
      %c0_19 = arith.constant 0 : index
      %c0_20 = arith.constant 0 : index
      %40 = vector.load %arg8[%c0_19, %c0_20] : memref<384x128xf32, #tpu.memory_space<vmem>>, vector<384x128xf32>
      %41 = arith.index_cast %1 : i32 to index
      %c0_21 = arith.constant 0 : index
      %42 = vector.load %arg7[%41, %c0_21] : memref<384x128xf32, #tpu.memory_space<vmem>>, vector<384x128xf32>
      %43 = arith.addf %42, %40 : vector<384x128xf32>
      %44 = arith.index_cast %1 : i32 to index
      %c0_22 = arith.constant 0 : index
      %45 = vector.load %arg7[%44, %c0_22] : memref<384x128xf32, #tpu.memory_space<vmem>>, vector<384x128xf32>
      tpu.vector_store %arg7[%44, %c0_22], %43 {strides = array<i32>} : memref<384x128xf32, #tpu.memory_space<vmem>>, vector<384x128xf32>,
      %46 = arith.truncf %40 : vector<384x128xf32> to vector<384x128xbf16>
      %47 = arith.index_cast %14 : i32 to index
      %48 = arith.index_cast %1 : i32 to index
      %c0_23 = arith.constant 0 : index
      %49 = vector.load %arg6[%47, %48, %c0_23] : memref<2x384x128xbf16, #tpu.memory_space<vmem>>, vector<1x384x128xbf16>
      %50 = vector.shape_cast %49 : vector<1x384x128xbf16> to vector<384x128xbf16>
      %51 = vector.shape_cast %46 : vector<384x128xbf16> to vector<1x384x128xbf16>
      tpu.vector_store %arg6[%47, %48, %c0_23], %51 {strides = array<i32>} : memref<2x384x128xbf16, #tpu.memory_space<vmem>>, vector<1x384x128xbf16>,
    } else {
    }
    %c0_i32_16 = arith.constant 0 : i32
    %35 = arith.cmpi eq, %arg2, %c0_i32_16 : i32
    %c2_i32_17 = arith.constant 2 : i32
    %36 = arith.cmpi eq, %arg0, %c2_i32_17 : i32
    %37 = arith.andi %35, %36 : i1
    %38 = arith.extui %37 : i1 to i32
    %c0_i32_18 = arith.constant 0 : i32
    %39 = arith.cmpi ne, %38, %c0_i32_18 : i32
    scf.if %39 {
      %40 = arith.index_cast %1 : i32 to index
      %c0_19 = arith.constant 0 : index
      %41 = vector.load %arg7[%40, %c0_19] : memref<384x128xf32, #tpu.memory_space<vmem>>, vector<384x128xf32>
      %c0_20 = arith.constant 0 : index
      %c0_21 = arith.constant 0 : index
      %42 = vector.load %arg5[%c0_20, %c0_21] : memref<384x128xf32, #tpu.memory_space<vmem>>, vector<384x128xf32>
      tpu.vector_store %arg5[%c0_20, %c0_21], %41 {strides = array<i32>} : memref<384x128xf32, #tpu.memory_space<vmem>>, vector<384x128xf32>,
    } else {
    }
    return
  }
  func.func @transform_0(%arg0: i32, %arg1: i32, %arg2: i32) -> (i32, i32) {
    %c0_i32 = arith.constant 0 : i32
    %0 = arith.cmpi eq, %arg0, %c0_i32 : i32
    %c0_i32_0 = arith.constant 0 : i32
    %1 = arith.cmpi eq, %arg1, %c0_i32_0 : i32
    %2 = arith.andi %0, %1 : i1
    %c0_i32_1 = arith.constant 0 : i32
    %3 = arith.select %2, %arg2, %c0_i32_1 : i32
    %c0_i32_2 = arith.constant 0 : i32
    %c0_i32_3 = arith.constant 0 : i32
    return %3, %c0_i32_2 : i32, i32
  }
  func.func @transform_1(%arg0: i32, %arg1: i32, %arg2: i32) -> (i32, i32) {
    %c0_i32 = arith.constant 0 : i32
    return %arg1, %arg2 : i32, i32
  }
  func.func @transform_2(%arg0: i32, %arg1: i32, %arg2: i32) -> (i32, i32) {
    %c2_i32 = arith.constant 2 : i32
    %0 = arith.cmpi eq, %arg0, %c2_i32 : i32
    %c0_i32 = arith.constant 0 : i32
    %1 = arith.select %0, %arg1, %c0_i32 : i32
    %c0_i32_0 = arith.constant 0 : i32
    %c0_i32_1 = arith.constant 0 : i32
    return %1, %c0_i32_0 : i32, i32
  }
}

</mosaic_0001>

<llo_original>
// kernel: hyperconv_forward.1
$region0: #{hyperconv_forward.1}
  #allocation0 [shape = 'u32[]', space=smem, size = 0x4, offset = 0x4, fixed_abs, tag = 'smem constant byte address 0x4 - core index']
  #allocation1 [shape = 'u32[144,128]{1,0:T(1,128)}', space=vmem, size = 0x12000, scoped, tag = 'internal scratch']
  #allocation2 [shape = 'bf16[2,384,128]{2,1,0:T(16,128)(2,1)}', space=vmem, size = 0x30000, scoped, tag = 'scratch operand']
  #allocation3 [shape = 'f32[384,128]{1,0:T(8,128)}', space=vmem, size = 0x30000, scoped, tag = 'scratch operand']
  #allocation4 [shape = 'f32[384,128]{1,0:T(8,128)}', space=vmem, size = 0x30000, scoped, tag = 'scratch operand']
  %s0 = inlined_call_operand.vmem [shape: f32[384,128], index: 0, kind: input, shape index: {}]
  %s1 = inlined_call_operand.vmem [shape: bf16[384,384], index: 1, kind: input, shape index: {}]
  %s2 = inlined_call_operand.vmem [shape: f32[384,128], index: 2, kind: output, shape index: {}]
  %s3 = sld [smem:[#allocation0]]
  $region61: #{hyperconv_forward.1} parent=0
    _
  %s5 = ssub.s32 1, %s3
  %s6 = scalar_select 0, %s5, %s3
  loop: start=0, step=1, limit=5
  $region2: #{hyperconv_forward.1} parent=0 // loop_pre_header
    _
  $region3: #{hyperconv_forward.1} parent=0 // loop_header
    %s8 = sphi 0, %s12
    %p9 = scmp.ge.s32.totalorder %s8, 5
    %s15 = sphi 0, %s34
    %s16 = sphi 0, %s30
    %s17 = sphi 0, %s26
    %s18 = sphi 0, %s15
    %s19 = sphi 0, %s16
    %s20 = sphi 0, %s17
    %s21 = sphi 0, %s18
    %s22 = sphi 0, %s19
    %s23 = sphi 0, %s20
    %s47 = sphi 0, %s49
    %s50 = sphi 0, %s47
    %s51 = sphi 0, %s50
    %s67 = sphi 0, %s51
    %s75 = sphi 0, %s77
    %s78 = sphi 0, %s75
    %s79 = sphi 0, %s78
    %s95 = sphi 0, %s79
    %s105 = sphi 0, %s107
    %s108 = sphi 0, %s105
    %s109 = sphi 0, %s108
    %s125 = sphi 0, %s109
  $region4: #{hyperconv_forward.1} parent=0 // loop_header_branch
    %11 = sbr.rel (%p9) target = $region8
  $region5: #{hyperconv_forward.1} parent=0 // loop_body
    %s13 = ssub.s32 %s8, 1
    %s14 = ssub.s32 %s8, 2
    %s24 = sadd.s32 1, %s17
    %p25 = scmp.ge.s32.totalorder %s24, 1
    %s26 = scalar_select %p25, 0, %s24
    %s27 = sadd.s32 1, %s16
    %s28 = scalar_select %p25, %s27, %s16
    %p29 = scmp.ge.s32.totalorder %s28, 1
    %s30 = scalar_select %p29, 0, %s28
    %s31 = sadd.s32 1, %s15
    %s32 = scalar_select %p29, %s31, %s15
    %p33 = scmp.ge.s32.totalorder %s32, 3
    %s34 = scalar_select %p33, 0, %s32
    %p35 = scmp.eq.s32.totalorder %s15, 0
    %p36 = scmp.eq.s32.totalorder %s16, 0
    %p37 = pnand %p35, %p36
    %p38 = pneg %p37
    %s39 = scalar_select %p38, %s17, 0
    %p40 = scmp.eq.s32.totalorder %s34, 0
    %p41 = scmp.eq.s32.totalorder %s30, 0
    %p42 = pnand %p40, %p41
    %p43 = pneg %p42
    %s44 = scalar_select %p43, %s26, 0
    %s45 = ssub.s32 %s39, %s44
    %p46 = scmp.eq.s32.totalorder %s45, 0
    %s48 = sadd.s32 %s47, 1
    %s49 = scalar_select %p46, %s47, %s48
    %p52 = pneg %p46
    %p53 = scmp.eq.s32.totalorder %s8, 2
    %p54 = por %p52, %p53
    %p55 = scmp.ne.s32.totalorder %s47, %s50
    %p56 = scmp.eq.s32.totalorder %s8, 0
    %p57 = por %p55, %p56
    %p58 = scmp.ne.s32.totalorder %s47, %s50
    %p59 = scmp.eq.s32.totalorder %s13, 2
    %p60 = por %p58, %p59
    %p61 = scmp.ne.s32.totalorder %s50, %s51
    %p62 = scmp.eq.s32.totalorder %s13, 0
    %p63 = por %p61, %p62
    %p64 = scmp.ne.s32.totalorder %s50, %s51
    %p65 = scmp.eq.s32.totalorder %s14, 2
    %p66 = por %p64, %p65
    %p68 = scmp.ne.s32.totalorder %s51, %s67
    %p69 = scmp.eq.s32.totalorder %s14, 0
    %p70 = por %p68, %p69
    %s71 = ssub.s32 %s16, %s30
    %s72 = ssub.s32 %s17, %s26
    %s73 = sor.u32 %s71, %s72
    %p74 = scmp.eq.s32.totalorder %s73, 0
    %s76 = sadd.s32 %s75, 1
    %s77 = scalar_select %p74, %s75, %s76
    %p80 = pneg %p74
    %p81 = scmp.eq.s32.totalorder %s8, 2
    %p82 = por %p80, %p81
    %p83 = scmp.ne.s32.totalorder %s75, %s78
    %p84 = scmp.eq.s32.totalorder %s8, 0
    %p85 = por %p83, %p84
    %p86 = scmp.ne.s32.totalorder %s75, %s78
    %p87 = scmp.eq.s32.totalorder %s13, 2
    %p88 = por %p86, %p87
    %p89 = scmp.ne.s32.totalorder %s78, %s79
    %p90 = scmp.eq.s32.totalorder %s13, 0
    %p91 = por %p89, %p90
    %p92 = scmp.ne.s32.totalorder %s78, %s79
    %p93 = scmp.eq.s32.totalorder %s14, 2
    %p94 = por %p92, %p93
    %p96 = scmp.ne.s32.totalorder %s79, %s95
    %p97 = scmp.eq.s32.totalorder %s14, 0
    %p98 = por %p96, %p97
    %p99 = scmp.eq.s32.totalorder %s15, 2
    %s100 = scalar_select %p99, %s16, 0
    %p101 = scmp.eq.s32.totalorder %s34, 2
    %s102 = scalar_select %p101, %s30, 0
    %s103 = ssub.s32 %s100, %s102
    %p104 = scmp.eq.s32.totalorder %s103, 0
    %s106 = sadd.s32 %s105, 1
    %s107 = scalar_select %p104, %s105, %s106
    %p110 = pneg %p104
    %p111 = scmp.eq.s32.totalorder %s8, 2
    %p112 = por %p110, %p111
    %p113 = scmp.ne.s32.totalorder %s105, %s108
    %p114 = scmp.eq.s32.totalorder %s8, 0
    %p115 = por %p113, %p114
    %p116 = scmp.ne.s32.totalorder %s105, %s108
    %p117 = scmp.eq.s32.totalorder %s13, 2
    %p118 = por %p116, %p117
    %p119 = scmp.ne.s32.totalorder %s108, %s109
    %p120 = scmp.eq.s32.totalorder %s13, 0
    %p121 = por %p119, %p120
    %p122 = scmp.ne.s32.totalorder %s108, %s109
    %p123 = scmp.eq.s32.totalorder %s14, 2
    %p124 = por %p122, %p123
    %p126 = scmp.ne.s32.totalorder %s109, %s125
    %p127 = scmp.eq.s32.totalorder %s14, 0
    %p128 = por %p126, %p127
    %p129 = scmp.le.s32.totalorder 1, %s8
    %p130 = scmp.lt.s32.totalorder %s8, 4
    %p131 = pnand %p129, %p130
    %p132 = pneg %p131
    // Predicated region
    $region9: #{hyperconv_forward.1} parent=5 // pred_check
      _
    $region10: #{hyperconv_forward.1} parent=5 // pred_check_branch
      %134 = sbr.rel (%p131) target = $region12
    $region11: #{hyperconv_forward.1} parent=5 // pred_region
      %s135 = ssub.s32 %s8, 1
      // Predicated region
      $region13: #{hyperconv_forward.1} parent=11 // pred_check
        %p136 = pneg %p91
      $region14: #{hyperconv_forward.1} parent=11 // pred_check_branch
        %138 = sbr.rel (%p136) target = $region16
      $region15: #{hyperconv_forward.1} parent=11 // pred_region
        %s139 = smul.u32 48, %s19
        %s140 = smul.u32 3, %s20
        %p141 = scmp.lt.s32.totalorder %s139, 47
        %s142 = scalar_select %p141, %s139, 47
        %p143 = scmp.lt.s32.totalorder %s140, 2
        %s144 = scalar_select %p143, %s140, 2
        %s145 = smul.addr %s142, 3
        %s146 = sadd.s32 %s144, %s145
        %s147 = smul.addr %s146, 4
        %s148 = scalar_lea.vmem %s1, %s147
        %s149 = smul.u32 48, %s19
        %s150 = smul.u32 3, %s20
      $region16: #{hyperconv_forward.1} parent=11 // pred_fallthru
        _
    $region12: #{hyperconv_forward.1} parent=5 // pred_fallthru
      _
    %p151 = scmp.lt.s32.totalorder %s8, 3
    // Predicated region
    $region17: #{hyperconv_forward.1} parent=5 // pred_check
      %p152 = pneg %p151
    $region18: #{hyperconv_forward.1} parent=5 // pred_check_branch
      %154 = sbr.rel (%p152) target = $region20
    $region19: #{hyperconv_forward.1} parent=5 // pred_region
      // Predicated region
      $region21: #{hyperconv_forward.1} parent=19 // pred_check
        %p155 = pneg %p57
      $region22: #{hyperconv_forward.1} parent=19 // pred_check_branch
        %157 = sbr.rel (%p155) target = $region24
      $region23: #{hyperconv_forward.1} parent=19 // pred_region
        %p158 = scmp.eq.s32.totalorder %s15, 0
        %p159 = scmp.eq.s32.totalorder %s16, 0
        %p160 = pnand %p158, %p159
        %p161 = pneg %p160
        %s162 = scalar_select %p161, %s17, 0
        %s163 = smul.u32 48, %s162
        %p164 = scmp.lt.s32.totalorder %s163, 47
        %s165 = scalar_select %p164, %s163, 47
        %s166 = smul.addr %s165, 8
        %s167 = scalar_lea.vmem %s0, %s166
        %p168 = scmp.eq.s32.totalorder %s15, 0
        %p169 = scmp.eq.s32.totalorder %s16, 0
        %p170 = pnand %p168, %p169
        %p171 = pneg %p170
        %s172 = scalar_select %p171, %s17, 0
        %s173 = smul.u32 48, %s172
      $region24: #{hyperconv_forward.1} parent=19 // pred_fallthru
        _
    $region20: #{hyperconv_forward.1} parent=5 // pred_fallthru
      _
    %p174 = scmp.le.s32.totalorder 1, %s8
    %p175 = scmp.lt.s32.totalorder %s8, 4
    %p176 = pnand %p174, %p175
    %p177 = pneg %p176
    // Predicated region
    $region25: #{hyperconv_forward.1} parent=5 // pred_check
      _
    $region26: #{hyperconv_forward.1} parent=5 // pred_check_branch
      %179 = sbr.rel (%p176) target = $region28
    $region27: #{hyperconv_forward.1} parent=5 // pred_region
      %s180 = ssub.s32 %s8, 1
      %p181 = scmp.eq.s32.totalorder %s18, 0
      %p182 = scmp.eq.s32.totalorder %s19, 0
      %p183 = pnand %p181, %p182
      %p184 = pneg %p183
      %s185 = scalar_select %p184, %s20, 0
      %s186 = smul.u32 48, %s185
      %p187 = scmp.lt.s32.totalorder %s186, 47
      %s188 = scalar_select %p187, %s186, 47
      %s189 = smul.addr %s188, 8
      %s190 = scalar_lea.vmem %s0, %s189
      %p191 = pneg %p63
      %p192 = pneg %p60
      %s193 = smul.u32 48, %s19
      %s194 = smul.u32 3, %s20
      %p195 = scmp.lt.s32.totalorder %s193, 47
      %s196 = scalar_select %p195, %s193, 47
      %p197 = scmp.lt.s32.totalorder %s194, 2
      %s198 = scalar_select %p197, %s194, 2
      %s199 = smul.addr %s196, 3
      %s200 = sadd.s32 %s198, %s199
      %s201 = smul.addr %s200, 4
      %s202 = scalar_lea.vmem %s1, %s201
      %p203 = pneg %p91
      %p204 = pneg %p88
      %p205 = pneg %p121
      %p206 = pneg %p118
      %p207 = scmp.eq.s32.totalorder %s18, 2
      %s208 = scalar_select %p207, %s19, 0
      %s209 = smul.u32 48, %s208
      %p210 = scmp.lt.s32.totalorder %s209, 47
      %s211 = scalar_select %p210, %s209, 47
      %s212 = smul.addr %s211, 8
      %s213 = scalar_lea.vmem %s2, %s212
      %p214 = scmp.eq.s32.totalorder %s18, 0
      %p215 = scmp.eq.s32.totalorder %s19, 0
      %p216 = pnand %p214, %p215
      %p217 = pneg %p216
      %s218 = scalar_select %p217, %s20, 0
      %s219 = smul.u32 48, %s218
      %p220 = scmp.lt.s32.totalorder %s219, 47
      %s221 = scalar_select %p220, %s219, 47
      %s222 = smul.addr %s221, 8
      %s223 = scalar_lea.vmem %s0, %s222
      %p224 = scmp.eq.s32.totalorder %s18, 0
      %p225 = scmp.eq.s32.totalorder %s19, 0
      %p226 = pnand %p224, %p225
      %p227 = pneg %p226
      %s228 = scalar_select %p227, %s20, 0
      %s229 = smul.u32 48, %s228
      %s230 = smul.u32 48, %s19
      %s231 = smul.u32 3, %s20
      %p232 = scmp.lt.s32.totalorder %s230, 47
      %s233 = scalar_select %p232, %s230, 47
      %p234 = scmp.lt.s32.totalorder %s231, 2
      %s235 = scalar_select %p234, %s231, 2
      %s236 = smul.addr %s233, 3
      %s237 = sadd.s32 %s235, %s236
      %s238 = smul.addr %s237, 4
      %s239 = scalar_lea.vmem %s1, %s238
      %s240 = smul.u32 48, %s19
      %s241 = smul.u32 3, %s20
      %p242 = scmp.eq.s32.totalorder %s18, 2
      %s243 = scalar_select %p242, %s19, 0
      %s244 = smul.u32 48, %s243
      %p245 = scmp.lt.s32.totalorder %s244, 47
      %s246 = scalar_select %p245, %s244, 47
      %s247 = smul.addr %s246, 8
      %s248 = scalar_lea.vmem %s2, %s247
      %p249 = scmp.eq.s32.totalorder %s18, 2
      %s250 = scalar_select %p249, %s19, 0
      %s251 = smul.u32 48, %s250
      %s253 = smul.u32 %s19, 384
      %s254 = smul.u32 %s20, 384
      %p255 = scmp.lt.s32.totalorder %s18, 0
      %s256 = ssub.s32 0, %s18
      %s257 = scalar_select %p255, %s256, %s18
      %s258 = sand.u32 %s257, 1
      %s259 = ssub.s32 0, %s258
      %s260 = scalar_select %p255, %s259, %s258
      %p261 = scmp.ne.s32.totalorder %s260, 0
      %p262 = scmp.lt.s32.totalorder %s260, 0
      %p263 = pnand %p262, %p261
      %p264 = pneg %p263
      %s265 = sadd.s32 %s260, 2
      %s266 = scalar_select %p264, %s265, %s260
      %s267 = ssub.s32 1, %s266
      %p268 = scmp.eq.s32.totalorder %s18, 0
      %p269 = scmp.eq.s32.totalorder %s19, 0
      %p270 = pnand %p268, %p269
      %p271 = pneg %p270
      // Predicated region
      $region29: #{hyperconv_forward.1} parent=27 // pred_check
        _
      $region30: #{hyperconv_forward.1} parent=27 // pred_check_branch
        %273 = sbr.rel (%p270) target = $region32
      $region31: #{hyperconv_forward.1} parent=27 // pred_region
        %v274 = vld [vmem:[%s223] sm:$0xff]
        %v275 = vld [vmem:[%s223 + $0x8] sm:$0xff]
        %v276 = vld [vmem:[%s223 + $0x10] sm:$0xff]
        %v277 = vld [vmem:[%s223 + $0x18] sm:$0xff]
        %v278 = vld [vmem:[%s223 + $0x20] sm:$0xff]
        %v279 = vld [vmem:[%s223 + $0x28] sm:$0xff]
        %v280 = vld [vmem:[%s223 + $0x30] sm:$0xff]
        %v281 = vld [vmem:[%s223 + $0x38] sm:$0xff]
        %v282 = vld [vmem:[%s223 + $0x40] sm:$0xff]
        %v283 = vld [vmem:[%s223 + $0x48] sm:$0xff]
        %v284 = vld [vmem:[%s223 + $0x50] sm:$0xff]
        %v285 = vld [vmem:[%s223 + $0x58] sm:$0xff]
        %v286 = vld [vmem:[%s223 + $0x60] sm:$0xff]
        %v287 = vld [vmem:[%s223 + $0x68] sm:$0xff]
        %v288 = vld [vmem:[%s223 + $0x70] sm:$0xff]
        %v289 = vld [vmem:[%s223 + $0x78] sm:$0xff]
        %v290 = vld [vmem:[%s223 + $0x80] sm:$0xff]
        %v291 = vld [vmem:[%s223 + $0x88] sm:$0xff]
        %v292 = vld [vmem:[%s223 + $0x90] sm:$0xff]
        %v293 = vld [vmem:[%s223 + $0x98] sm:$0xff]
        %v294 = vld [vmem:[%s223 + $0xa0] sm:$0xff]
        %v295 = vld [vmem:[%s223 + $0xa8] sm:$0xff]
        %v296 = vld [vmem:[%s223 + $0xb0] sm:$0xff]
        %v297 = vld [vmem:[%s223 + $0xb8] sm:$0xff]
        %v298 = vld [vmem:[%s223 + $0xc0] sm:$0xff]
        %v299 = vld [vmem:[%s223 + $0xc8] sm:$0xff]
        %v300 = vld [vmem:[%s223 + $0xd0] sm:$0xff]
        %v301 = vld [vmem:[%s223 + $0xd8] sm:$0xff]
        %v302 = vld [vmem:[%s223 + $0xe0] sm:$0xff]
        %v303 = vld [vmem:[%s223 + $0xe8] sm:$0xff]
        %v304 = vld [vmem:[%s223 + $0xf0] sm:$0xff]
        %v305 = vld [vmem:[%s223 + $0xf8] sm:$0xff]
        %v306 = vld [vmem:[%s223 + $0x100] sm:$0xff]
        %v307 = vld [vmem:[%s223 + $0x108] sm:$0xff]
        %v308 = vld [vmem:[%s223 + $0x110] sm:$0xff]
        %v309 = vld [vmem:[%s223 + $0x118] sm:$0xff]
        %v310 = vld [vmem:[%s223 + $0x120] sm:$0xff]
        %v311 = vld [vmem:[%s223 + $0x128] sm:$0xff]
        %v312 = vld [vmem:[%s223 + $0x130] sm:$0xff]
        %v313 = vld [vmem:[%s223 + $0x138] sm:$0xff]
        %v314 = vld [vmem:[%s223 + $0x140] sm:$0xff]
        %v315 = vld [vmem:[%s223 + $0x148] sm:$0xff]
        %v316 = vld [vmem:[%s223 + $0x150] sm:$0xff]
        %v317 = vld [vmem:[%s223 + $0x158] sm:$0xff]
        %v318 = vld [vmem:[%s223 + $0x160] sm:$0xff]
        %v319 = vld [vmem:[%s223 + $0x168] sm:$0xff]
        %v320 = vld [vmem:[%s223 + $0x170] sm:$0xff]
        %v321 = vld [vmem:[%s223 + $0x178] sm:$0xff]
        %v322 = vpack.c.bf16 %v275, %v274
        %v323 = vpack.c.bf16 %v277, %v276
        %v324 = vpack.c.bf16 %v279, %v278
        %v325 = vpack.c.bf16 %v281, %v280
        %v326 = vpack.c.bf16 %v283, %v282
        %v327 = vpack.c.bf16 %v285, %v284
        %v328 = vpack.c.bf16 %v287, %v286
        %v329 = vpack.c.bf16 %v289, %v288
        %v330 = vpack.c.bf16 %v291, %v290
        %v331 = vpack.c.bf16 %v293, %v292
        %v332 = vpack.c.bf16 %v295, %v294
        %v333 = vpack.c.bf16 %v297, %v296
        %v334 = vpack.c.bf16 %v299, %v298
        %v335 = vpack.c.bf16 %v301, %v300
        %v336 = vpack.c.bf16 %v303, %v302
        %v337 = vpack.c.bf16 %v305, %v304
        %v338 = vpack.c.bf16 %v307, %v306
        %v339 = vpack.c.bf16 %v309, %v308
        %v340 = vpack.c.bf16 %v311, %v310
        %v341 = vpack.c.bf16 %v313, %v312
        %v342 = vpack.c.bf16 %v315, %v314
        %v343 = vpack.c.bf16 %v317, %v316
        %v344 = vpack.c.bf16 %v319, %v318
        %v345 = vpack.c.bf16 %v321, %v320
        %s346 = sshra.s32 %s254, 4
        %s347 = sand.u32 %s254, 15
        %s348 = smul.addr %s346, 8
        %s349 = scalar_lea.vmem [#allocation2], %s348
        %350 = vst [vmem:[%s349] sm:$0xff] %v322
        %351 = vst [vmem:[%s349 + $0x8] sm:$0xff] %v323
        %352 = vst [vmem:[%s349 + $0x10] sm:$0xff] %v324
        %353 = vst [vmem:[%s349 + $0x18] sm:$0xff] %v325
        %354 = vst [vmem:[%s349 + $0x20] sm:$0xff] %v326
        %355 = vst [vmem:[%s349 + $0x28] sm:$0xff] %v327
        %356 = vst [vmem:[%s349 + $0x30] sm:$0xff] %v328
        %357 = vst [vmem:[%s349 + $0x38] sm:$0xff] %v329
        %358 = vst [vmem:[%s349 + $0x40] sm:$0xff] %v330
        %359 = vst [vmem:[%s349 + $0x48] sm:$0xff] %v331
        %360 = vst [vmem:[%s349 + $0x50] sm:$0xff] %v332
        %361 = vst [vmem:[%s349 + $0x58] sm:$0xff] %v333
        %362 = vst [vmem:[%s349 + $0x60] sm:$0xff] %v334
        %363 = vst [vmem:[%s349 + $0x68] sm:$0xff] %v335
        %364 = vst [vmem:[%s349 + $0x70] sm:$0xff] %v336
        %365 = vst [vmem:[%s349 + $0x78] sm:$0xff] %v337
        %366 = vst [vmem:[%s349 + $0x80] sm:$0xff] %v338
        %367 = vst [vmem:[%s349 + $0x88] sm:$0xff] %v339
        %368 = vst [vmem:[%s349 + $0x90] sm:$0xff] %v340
        %369 = vst [vmem:[%s349 + $0x98] sm:$0xff] %v341
        %370 = vst [vmem:[%s349 + $0xa0] sm:$0xff] %v342
        %371 = vst [vmem:[%s349 + $0xa8] sm:$0xff] %v343
        %372 = vst [vmem:[%s349 + $0xb0] sm:$0xff] %v344
        %373 = vst [vmem:[%s349 + $0xb8] sm:$0xff] %v345
        %s374 = scalar_lea.vmem [#allocation3], %s254
        %375 = vst [vmem:[%s374] sm:$0xff] %v274
        %376 = vst [vmem:[%s374 + $0x8] sm:$0xff] %v275
        %377 = vst [vmem:[%s374 + $0x10] sm:$0xff] %v276
        %378 = vst [vmem:[%s374 + $0x18] sm:$0xff] %v277
        %379 = vst [vmem:[%s374 + $0x20] sm:$0xff] %v278
        %380 = vst [vmem:[%s374 + $0x28] sm:$0xff] %v279
        %381 = vst [vmem:[%s374 + $0x30] sm:$0xff] %v280
        %382 = vst [vmem:[%s374 + $0x38] sm:$0xff] %v281
        %383 = vst [vmem:[%s374 + $0x40] sm:$0xff] %v282
        %384 = vst [vmem:[%s374 + $0x48] sm:$0xff] %v283
        %385 = vst [vmem:[%s374 + $0x50] sm:$0xff] %v284
        %386 = vst [vmem:[%s374 + $0x58] sm:$0xff] %v285
        %387 = vst [vmem:[%s374 + $0x60] sm:$0xff] %v286
        %388 = vst [vmem:[%s374 + $0x68] sm:$0xff] %v287
        %389 = vst [vmem:[%s374 + $0x70] sm:$0xff] %v288
        %390 = vst [vmem:[%s374 + $0x78] sm:$0xff] %v289
        %391 = vst [vmem:[%s374 + $0x80] sm:$0xff] %v290
        %392 = vst [vmem:[%s374 + $0x88] sm:$0xff] %v291
        %393 = vst [vmem:[%s374 + $0x90] sm:$0xff] %v292
        %394 = vst [vmem:[%s374 + $0x98] sm:$0xff] %v293
        %395 = vst [vmem:[%s374 + $0xa0] sm:$0xff] %v294
        %396 = vst [vmem:[%s374 + $0xa8] sm:$0xff] %v295
        %397 = vst [vmem:[%s374 + $0xb0] sm:$0xff] %v296
        %398 = vst [vmem:[%s374 + $0xb8] sm:$0xff] %v297
        %399 = vst [vmem:[%s374 + $0xc0] sm:$0xff] %v298
        %400 = vst [vmem:[%s374 + $0xc8] sm:$0xff] %v299
        %401 = vst [vmem:[%s374 + $0xd0] sm:$0xff] %v300
        %402 = vst [vmem:[%s374 + $0xd8] sm:$0xff] %v301
        %403 = vst [vmem:[%s374 + $0xe0] sm:$0xff] %v302
        %404 = vst [vmem:[%s374 + $0xe8] sm:$0xff] %v303
        %405 = vst [vmem:[%s374 + $0xf0] sm:$0xff] %v304
        %406 = vst [vmem:[%s374 + $0xf8] sm:$0xff] %v305
        %407 = vst [vmem:[%s374 + $0x100] sm:$0xff] %v306
        %408 = vst [vmem:[%s374 + $0x108] sm:$0xff] %v307
        %409 = vst [vmem:[%s374 + $0x110] sm:$0xff] %v308
        %410 = vst [vmem:[%s374 + $0x118] sm:$0xff] %v309
        %411 = vst [vmem:[%s374 + $0x120] sm:$0xff] %v310
        %412 = vst [vmem:[%s374 + $0x128] sm:$0xff] %v311
        %413 = vst [vmem:[%s374 + $0x130] sm:$0xff] %v312
        %414 = vst [vmem:[%s374 + $0x138] sm:$0xff] %v313
        %415 = vst [vmem:[%s374 + $0x140] sm:$0xff] %v314
        %416 = vst [vmem:[%s374 + $0x148] sm:$0xff] %v315
        %417 = vst [vmem:[%s374 + $0x150] sm:$0xff] %v316
        %418 = vst [vmem:[%s374 + $0x158] sm:$0xff] %v317
        %419 = vst [vmem:[%s374 + $0x160] sm:$0xff] %v318
        %420 = vst [vmem:[%s374 + $0x168] sm:$0xff] %v319
        %421 = vst [vmem:[%s374 + $0x170] sm:$0xff] %v320
        %422 = vst [vmem:[%s374 + $0x178] sm:$0xff] %v321
      $region32: #{hyperconv_forward.1} parent=27 // pred_fallthru
        _
      %v423 = vld [vmem:[%s239] sm:$0xff]
      %v424 = vld [vmem:[%s239 + $0x8] sm:$0xf]
      %v425 = vld [vmem:[%s239 + $0xc] sm:$0xff]
      %v426 = vld [vmem:[%s239 + $0x14] sm:$0xf]
      %v427 = vld [vmem:[%s239 + $0x18] sm:$0xff]
      %v428 = vld [vmem:[%s239 + $0x20] sm:$0xf]
      %v429 = vld [vmem:[%s239 + $0x24] sm:$0xff]
      %v430 = vld [vmem:[%s239 + $0x2c] sm:$0xf]
      %v431 = vld [vmem:[%s239 + $0x30] sm:$0xff]
      %v432 = vld [vmem:[%s239 + $0x38] sm:$0xf]
      %v433 = vld [vmem:[%s239 + $0x3c] sm:$0xff]
      %v434 = vld [vmem:[%s239 + $0x44] sm:$0xf]
      %v435 = vld [vmem:[%s239 + $0x48] sm:$0xff]
      %v436 = vld [vmem:[%s239 + $0x50] sm:$0xf]
      %v437 = vld [vmem:[%s239 + $0x54] sm:$0xff]
      %v438 = vld [vmem:[%s239 + $0x5c] sm:$0xf]
      %v439 = vld [vmem:[%s239 + $0x60] sm:$0xff]
      %v440 = vld [vmem:[%s239 + $0x68] sm:$0xf]
      %v441 = vld [vmem:[%s239 + $0x6c] sm:$0xff]
      %v442 = vld [vmem:[%s239 + $0x74] sm:$0xf]
      %v443 = vld [vmem:[%s239 + $0x78] sm:$0xff]
      %v444 = vld [vmem:[%s239 + $0x80] sm:$0xf]
      %v445 = vld [vmem:[%s239 + $0x84] sm:$0xff]
      %v446 = vld [vmem:[%s239 + $0x8c] sm:$0xf]
      %v447 = vld [vmem:[%s239 + $0x90] sm:$0xff]
      %v448 = vld [vmem:[%s239 + $0x98] sm:$0xf]
      %v449 = vld [vmem:[%s239 + $0x9c] sm:$0xff]
      %v450 = vld [vmem:[%s239 + $0xa4] sm:$0xf]
      %v451 = vld [vmem:[%s239 + $0xa8] sm:$0xff]
      %v452 = vld [vmem:[%s239 + $0xb0] sm:$0xf]
      %v453 = vld [vmem:[%s239 + $0xb4] sm:$0xff]
      %v454 = vld [vmem:[%s239 + $0xbc] sm:$0xf]
      %v455 = vld [vmem:[%s239 + $0xc0] sm:$0xff]
      %v456 = vld [vmem:[%s239 + $0xc8] sm:$0xf]
      %v457 = vld [vmem:[%s239 + $0xcc] sm:$0xff]
      %v458 = vld [vmem:[%s239 + $0xd4] sm:$0xf]
      %v459 = vld [vmem:[%s239 + $0xd8] sm:$0xff]
      %v460 = vld [vmem:[%s239 + $0xe0] sm:$0xf]
      %v461 = vld [vmem:[%s239 + $0xe4] sm:$0xff]
      %v462 = vld [vmem:[%s239 + $0xec] sm:$0xf]
      %v463 = vld [vmem:[%s239 + $0xf0] sm:$0xff]
      %v464 = vld [vmem:[%s239 + $0xf8] sm:$0xf]
      %v465 = vld [vmem:[%s239 + $0xfc] sm:$0xff]
      %v466 = vld [vmem:[%s239 + $0x104] sm:$0xf]
      %v467 = vld [vmem:[%s239 + $0x108] sm:$0xff]
      %v468 = vld [vmem:[%s239 + $0x110] sm:$0xf]
      %v469 = vld [vmem:[%s239 + $0x114] sm:$0xff]
      %v470 = vld [vmem:[%s239 + $0x11c] sm:$0xf]
      %v471 = vld [vmem:[%s239 + $0x120] sm:$0xff]
      %v472 = vld [vmem:[%s239 + $0x128] sm:$0xf]
      %v473 = vld [vmem:[%s239 + $0x12c] sm:$0xff]
      %v474 = vld [vmem:[%s239 + $0x134] sm:$0xf]
      %v475 = vld [vmem:[%s239 + $0x138] sm:$0xff]
      %v476 = vld [vmem:[%s239 + $0x140] sm:$0xf]
      %v477 = vld [vmem:[%s239 + $0x144] sm:$0xff]
      %v478 = vld [vmem:[%s239 + $0x14c] sm:$0xf]
      %v479 = vld [vmem:[%s239 + $0x150] sm:$0xff]
      %v480 = vld [vmem:[%s239 + $0x158] sm:$0xf]
      %v481 = vld [vmem:[%s239 + $0x15c] sm:$0xff]
      %v482 = vld [vmem:[%s239 + $0x164] sm:$0xf]
      %v483 = vld [vmem:[%s239 + $0x168] sm:$0xff]
      %v484 = vld [vmem:[%s239 + $0x170] sm:$0xf]
      %v485 = vld [vmem:[%s239 + $0x174] sm:$0xff]
      %v486 = vld [vmem:[%s239 + $0x17c] sm:$0xf]
      %v487 = vld [vmem:[%s239 + $0x180] sm:$0xff]
      %v488 = vld [vmem:[%s239 + $0x188] sm:$0xf]
      %v489 = vld [vmem:[%s239 + $0x18c] sm:$0xff]
      %v490 = vld [vmem:[%s239 + $0x194] sm:$0xf]
      %v491 = vld [vmem:[%s239 + $0x198] sm:$0xff]
      %v492 = vld [vmem:[%s239 + $0x1a0] sm:$0xf]
      %v493 = vld [vmem:[%s239 + $0x1a4] sm:$0xff]
      %v494 = vld [vmem:[%s239 + $0x1ac] sm:$0xf]
      %v495 = vld [vmem:[%s239 + $0x1b0] sm:$0xff]
      %v496 = vld [vmem:[%s239 + $0x1b8] sm:$0xf]
      %v497 = vld [vmem:[%s239 + $0x1bc] sm:$0xff]
      %v498 = vld [vmem:[%s239 + $0x1c4] sm:$0xf]
      %v499 = vld [vmem:[%s239 + $0x1c8] sm:$0xff]
      %v500 = vld [vmem:[%s239 + $0x1d0] sm:$0xf]
      %v501 = vld [vmem:[%s239 + $0x1d4] sm:$0xff]
      %v502 = vld [vmem:[%s239 + $0x1dc] sm:$0xf]
      %v503 = vld [vmem:[%s239 + $0x1e0] sm:$0xff]
      %v504 = vld [vmem:[%s239 + $0x1e8] sm:$0xf]
      %v505 = vld [vmem:[%s239 + $0x1ec] sm:$0xff]
      %v506 = vld [vmem:[%s239 + $0x1f4] sm:$0xf]
      %v507 = vld [vmem:[%s239 + $0x1f8] sm:$0xff]
      %v508 = vld [vmem:[%s239 + $0x200] sm:$0xf]
      %v509 = vld [vmem:[%s239 + $0x204] sm:$0xff]
      %v510 = vld [vmem:[%s239 + $0x20c] sm:$0xf]
      %v511 = vld [vmem:[%s239 + $0x210] sm:$0xff]
      %v512 = vld [vmem:[%s239 + $0x218] sm:$0xf]
      %v513 = vld [vmem:[%s239 + $0x21c] sm:$0xff]
      %v514 = vld [vmem:[%s239 + $0x224] sm:$0xf]
      %v515 = vld [vmem:[%s239 + $0x228] sm:$0xff]
      %v516 = vld [vmem:[%s239 + $0x230] sm:$0xf]
      %v517 = vld [vmem:[%s239 + $0x234] sm:$0xff]
      %v518 = vld [vmem:[%s239 + $0x23c] sm:$0xf]
      %s519 = sshra.s32 %s254, 4
      %s520 = sand.u32 %s254, 15
      %s521 = smul.u32 %s266, 24
      %s522 = sadd.s32 %s519, %s521
      %s523 = smul.addr %s522, 8
      %s524 = scalar_lea.vmem [#allocation2], %s523
      %v525 = vld [vmem:[%s524] sm:$0xff]
      %v526 = vld [vmem:[%s524 + $0x8] sm:$0xff]
      %v527 = vld [vmem:[%s524 + $0x10] sm:$0xff]
      %v528 = vld [vmem:[%s524 + $0x18] sm:$0xff]
      %v529 = vld [vmem:[%s524 + $0x20] sm:$0xff]
      %v530 = vld [vmem:[%s524 + $0x28] sm:$0xff]
      %v531 = vld [vmem:[%s524 + $0x30] sm:$0xff]
      %v532 = vld [vmem:[%s524 + $0x38] sm:$0xff]
      %v533 = vld [vmem:[%s524 + $0x40] sm:$0xff]
      %v534 = vld [vmem:[%s524 + $0x48] sm:$0xff]
      %v535 = vld [vmem:[%s524 + $0x50] sm:$0xff]
      %v536 = vld [vmem:[%s524 + $0x58] sm:$0xff]
      %v537 = vld [vmem:[%s524 + $0x60] sm:$0xff]
      %v538 = vld [vmem:[%s524 + $0x68] sm:$0xff]
      %v539 = vld [vmem:[%s524 + $0x70] sm:$0xff]
      %v540 = vld [vmem:[%s524 + $0x78] sm:$0xff]
      %v541 = vld [vmem:[%s524 + $0x80] sm:$0xff]
      %v542 = vld [vmem:[%s524 + $0x88] sm:$0xff]
      %v543 = vld [vmem:[%s524 + $0x90] sm:$0xff]
      %v544 = vld [vmem:[%s524 + $0x98] sm:$0xff]
      %v545 = vld [vmem:[%s524 + $0xa0] sm:$0xff]
      %v546 = vld [vmem:[%s524 + $0xa8] sm:$0xff]
      %v547 = vld [vmem:[%s524 + $0xb0] sm:$0xff]
      %v548 = vld [vmem:[%s524 + $0xb8] sm:$0xff]
      %v645 = vunpack.c.l.b16 %v423
      %v646 = vunpack.c.h.b16 %v423
      %v647 = vunpack.c.l.b16 %v424
      %v648 = vunpack.c.l.b16 %v425
      %v649 = vunpack.c.h.b16 %v425
      %v650 = vunpack.c.l.b16 %v426
      %v651 = vunpack.c.l.b16 %v427
      %v652 = vunpack.c.h.b16 %v427
      %v653 = vunpack.c.l.b16 %v428
      %v654 = vunpack.c.l.b16 %v429
      %v655 = vunpack.c.h.b16 %v429
      %v656 = vunpack.c.l.b16 %v430
      %v657 = vunpack.c.l.b16 %v431
      %v658 = vunpack.c.h.b16 %v431
      %v659 = vunpack.c.l.b16 %v432
      %v660 = vunpack.c.l.b16 %v433
      %v661 = vunpack.c.h.b16 %v433
      %v662 = vunpack.c.l.b16 %v434
      %v663 = vunpack.c.l.b16 %v435
      %v664 = vunpack.c.h.b16 %v435
      %v665 = vunpack.c.l.b16 %v436
      %v666 = vunpack.c.l.b16 %v437
      %v667 = vunpack.c.h.b16 %v437
      %v668 = vunpack.c.l.b16 %v438
      %v669 = vunpack.c.l.b16 %v439
      %v670 = vunpack.c.h.b16 %v439
      %v671 = vunpack.c.l.b16 %v440
      %v672 = vunpack.c.l.b16 %v441
      %v673 = vunpack.c.h.b16 %v441
      %v674 = vunpack.c.l.b16 %v442
      %v675 = vunpack.c.l.b16 %v443
      %v676 = vunpack.c.h.b16 %v443
      %v677 = vunpack.c.l.b16 %v444
      %v678 = vunpack.c.l.b16 %v445
      %v679 = vunpack.c.h.b16 %v445
      %v680 = vunpack.c.l.b16 %v446
      %v681 = vunpack.c.l.b16 %v447
      %v682 = vunpack.c.h.b16 %v447
      %v683 = vunpack.c.l.b16 %v448
      %v684 = vunpack.c.l.b16 %v449
      %v685 = vunpack.c.h.b16 %v449
      %v686 = vunpack.c.l.b16 %v450
      %v687 = vunpack.c.l.b16 %v451
      %v688 = vunpack.c.h.b16 %v451
      %v689 = vunpack.c.l.b16 %v452
      %v690 = vunpack.c.l.b16 %v453
      %v691 = vunpack.c.h.b16 %v453
      %v692 = vunpack.c.l.b16 %v454
      %v693 = vunpack.c.l.b16 %v455
      %v694 = vunpack.c.h.b16 %v455
      %v695 = vunpack.c.l.b16 %v456
      %v696 = vunpack.c.l.b16 %v457
      %v697 = vunpack.c.h.b16 %v457
      %v698 = vunpack.c.l.b16 %v458
      %v699 = vunpack.c.l.b16 %v459
      %v700 = vunpack.c.h.b16 %v459
      %v701 = vunpack.c.l.b16 %v460
      %v702 = vunpack.c.l.b16 %v461
      %v703 = vunpack.c.h.b16 %v461
      %v704 = vunpack.c.l.b16 %v462
      %v705 = vunpack.c.l.b16 %v463
      %v706 = vunpack.c.h.b16 %v463
      %v707 = vunpack.c.l.b16 %v464
      %v708 = vunpack.c.l.b16 %v465
      %v709 = vunpack.c.h.b16 %v465
      %v710 = vunpack.c.l.b16 %v466
      %v711 = vunpack.c.l.b16 %v467
      %v712 = vunpack.c.h.b16 %v467
      %v713 = vunpack.c.l.b16 %v468
      %v714 = vunpack.c.l.b16 %v469
      %v715 = vunpack.c.h.b16 %v469
      %v716 = vunpack.c.l.b16 %v470
      %v717 = vunpack.c.l.b16 %v471
      %v718 = vunpack.c.h.b16 %v471
      %v719 = vunpack.c.l.b16 %v472
      %v720 = vunpack.c.l.b16 %v473
      %v721 = vunpack.c.h.b16 %v473
      %v722 = vunpack.c.l.b16 %v474
      %v723 = vunpack.c.l.b16 %v475
      %v724 = vunpack.c.h.b16 %v475
      %v725 = vunpack.c.l.b16 %v476
      %v726 = vunpack.c.l.b16 %v477
      %v727 = vunpack.c.h.b16 %v477
      %v728 = vunpack.c.l.b16 %v478
      %v729 = vunpack.c.l.b16 %v479
      %v730 = vunpack.c.h.b16 %v479
      %v731 = vunpack.c.l.b16 %v480
      %v732 = vunpack.c.l.b16 %v481
      %v733 = vunpack.c.h.b16 %v481
      %v734 = vunpack.c.l.b16 %v482
      %v735 = vunpack.c.l.b16 %v483
      %v736 = vunpack.c.h.b16 %v483
      %v737 = vunpack.c.l.b16 %v484
      %v738 = vunpack.c.l.b16 %v485
      %v739 = vunpack.c.h.b16 %v485
      %v740 = vunpack.c.l.b16 %v486
      %v741 = vunpack.c.l.b16 %v487
      %v742 = vunpack.c.h.b16 %v487
      %v743 = vunpack.c.l.b16 %v488
      %v744 = vunpack.c.l.b16 %v489
      %v745 = vunpack.c.h.b16 %v489
      %v746 = vunpack.c.l.b16 %v490
      %v747 = vunpack.c.l.b16 %v491
      %v748 = vunpack.c.h.b16 %v491
      %v749 = vunpack.c.l.b16 %v492
      %v750 = vunpack.c.l.b16 %v493
      %v751 = vunpack.c.h.b16 %v493
      %v752 = vunpack.c.l.b16 %v494
      %v753 = vunpack.c.l.b16 %v495
      %v754 = vunpack.c.h.b16 %v495
      %v755 = vunpack.c.l.b16 %v496
      %v756 = vunpack.c.l.b16 %v497
      %v757 = vunpack.c.h.b16 %v497
      %v758 = vunpack.c.l.b16 %v498
      %v759 = vunpack.c.l.b16 %v499
      %v760 = vunpack.c.h.b16 %v499
      %v761 = vunpack.c.l.b16 %v500
      %v762 = vunpack.c.l.b16 %v501
      %v763 = vunpack.c.h.b16 %v501
      %v764 = vunpack.c.l.b16 %v502
      %v765 = vunpack.c.l.b16 %v503
      %v766 = vunpack.c.h.b16 %v503
      %v767 = vunpack.c.l.b16 %v504
      %v768 = vunpack.c.l.b16 %v505
      %v769 = vunpack.c.h.b16 %v505
      %v770 = vunpack.c.l.b16 %v506
      %v771 = vunpack.c.l.b16 %v507
      %v772 = vunpack.c.h.b16 %v507
      %v773 = vunpack.c.l.b16 %v508
      %v774 = vunpack.c.l.b16 %v509
      %v775 = vunpack.c.h.b16 %v509
      %v776 = vunpack.c.l.b16 %v510
      %v777 = vunpack.c.l.b16 %v511
      %v778 = vunpack.c.h.b16 %v511
      %v779 = vunpack.c.l.b16 %v512
      %v780 = vunpack.c.l.b16 %v513
      %v781 = vunpack.c.h.b16 %v513
      %v782 = vunpack.c.l.b16 %v514
      %v783 = vunpack.c.l.b16 %v515
      %v784 = vunpack.c.h.b16 %v515
      %v785 = vunpack.c.l.b16 %v516
      %v786 = vunpack.c.l.b16 %v517
      %v787 = vunpack.c.h.b16 %v517
      %v788 = vunpack.c.l.b16 %v518
      %v789 = vpack.c.b16 %v648, %v645
      %v790 = vpack.c.b16 %v649, %v646
      %v791 = vpack.c.b16 %v650, %v647
      %v792 = vpack.c.b16 %v654, %v651
      %v793 = vpack.c.b16 %v655, %v652
      %v794 = vpack.c.b16 %v656, %v653
      %v795 = vpack.c.b16 %v660, %v657
      %v796 = vpack.c.b16 %v661, %v658
      %v797 = vpack.c.b16 %v662, %v659
      %v798 = vpack.c.b16 %v666, %v663
      %v799 = vpack.c.b16 %v667, %v664
      %v800 = vpack.c.b16 %v668, %v665
      %v801 = vpack.c.b16 %v672, %v669
      %v802 = vpack.c.b16 %v673, %v670
      %v803 = vpack.c.b16 %v674, %v671
      %v804 = vpack.c.b16 %v678, %v675
      %v805 = vpack.c.b16 %v679, %v676
      %v806 = vpack.c.b16 %v680, %v677
      %v807 = vpack.c.b16 %v684, %v681
      %v808 = vpack.c.b16 %v685, %v682
      %v809 = vpack.c.b16 %v686, %v683
      %v810 = vpack.c.b16 %v690, %v687
      %v811 = vpack.c.b16 %v691, %v688
      %v812 = vpack.c.b16 %v692, %v689
      %v813 = vpack.c.b16 %v696, %v693
      %v814 = vpack.c.b16 %v697, %v694
      %v815 = vpack.c.b16 %v698, %v695
      %v816 = vpack.c.b16 %v702, %v699
      %v817 = vpack.c.b16 %v703, %v700
      %v818 = vpack.c.b16 %v704, %v701
      %v819 = vpack.c.b16 %v708, %v705
      %v820 = vpack.c.b16 %v709, %v706
      %v821 = vpack.c.b16 %v710, %v707
      %v822 = vpack.c.b16 %v714, %v711
      %v823 = vpack.c.b16 %v715, %v712
      %v824 = vpack.c.b16 %v716, %v713
      %v825 = vpack.c.b16 %v720, %v717
      %v826 = vpack.c.b16 %v721, %v718
      %v827 = vpack.c.b16 %v722, %v719
      %v828 = vpack.c.b16 %v726, %v723
      %v829 = vpack.c.b16 %v727, %v724
      %v830 = vpack.c.b16 %v728, %v725
      %v831 = vpack.c.b16 %v732, %v729
      %v832 = vpack.c.b16 %v733, %v730
      %v833 = vpack.c.b16 %v734, %v731
      %v834 = vpack.c.b16 %v738, %v735
      %v835 = vpack.c.b16 %v739, %v736
      %v836 = vpack.c.b16 %v740, %v737
      %v837 = vpack.c.b16 %v744, %v741
      %v838 = vpack.c.b16 %v745, %v742
      %v839 = vpack.c.b16 %v746, %v743
      %v840 = vpack.c.b16 %v750, %v747
      %v841 = vpack.c.b16 %v751, %v748
      %v842 = vpack.c.b16 %v752, %v749
      %v843 = vpack.c.b16 %v756, %v753
      %v844 = vpack.c.b16 %v757, %v754
      %v845 = vpack.c.b16 %v758, %v755
      %v846 = vpack.c.b16 %v762, %v759
      %v847 = vpack.c.b16 %v763, %v760
      %v848 = vpack.c.b16 %v764, %v761
      %v849 = vpack.c.b16 %v768, %v765
      %v850 = vpack.c.b16 %v769, %v766
      %v851 = vpack.c.b16 %v770, %v767
      %v852 = vpack.c.b16 %v774, %v771
      %v853 = vpack.c.b16 %v775, %v772
      %v854 = vpack.c.b16 %v776, %v773
      %v855 = vpack.c.b16 %v780, %v777
      %v856 = vpack.c.b16 %v781, %v778
      %v857 = vpack.c.b16 %v782, %v779
      %v858 = vpack.c.b16 %v786, %v783
      %v859 = vpack.c.b16 %v787, %v784
      %v860 = vpack.c.b16 %v788, %v785
      %933 = vmatprep.subr.bf16.mxu0 0
      %934 = vmatpush1.bf16.msra.mxu0 %v525
      %935 = vmatprep.subr.bf16.mxu0 0
      %936 = vmatpush1.bf16.msra.mxu0 %v526
      %937 = vmatprep.subr.bf16.mxu0 0
      %938 = vmatpush1.bf16.msra.mxu0 %v527
      %939 = vmatprep.subr.bf16.mxu0 0
      %940 = vmatpush1.bf16.msra.mxu0 %v528
      %941 = vmatprep.subr.bf16.mxu0 0
      %942 = vmatpush1.bf16.msra.mxu0 %v529
      %943 = vmatprep.subr.bf16.mxu0 0
      %944 = vmatpush1.bf16.msra.mxu0 %v530
      %945 = vmatprep.subr.bf16.mxu0 0
      %946 = vmatpush1.bf16.msra.mxu0 %v531
      %947 = vmatprep.subr.bf16.mxu0 0
      %948 = vmatpush1.bf16.msra.mxu0 %v532
      %949 = vmatprep.subr.bf16.mxu0 0
      %950 = vmatpush1.bf16.msra.mxu0 %v533
      %951 = vmatprep.subr.bf16.mxu0 0
      %952 = vmatpush1.bf16.msra.mxu0 %v534
      %953 = vmatprep.subr.bf16.mxu0 0
      %954 = vmatpush1.bf16.msra.mxu0 %v535
      %955 = vmatprep.subr.bf16.mxu0 0
      %956 = vmatpush1.bf16.msra.mxu0 %v536
      %957 = vmatprep.subr.bf16.mxu0 0
      %958 = vmatpush1.bf16.msra.mxu0 %v537
      %959 = vmatprep.subr.bf16.mxu0 0
      %960 = vmatpush1.bf16.msra.mxu0 %v538
      %961 = vmatprep.subr.bf16.mxu0 0
      %962 = vmatpush1.bf16.msra.mxu0 %v539
      %963 = vmatprep.subr.bf16.mxu0 0
      %964 = vmatpush1.bf16.msra.mxu0 %v540
      %965 = vmatprep.mubr.bf16.mxu0 %v790
      %966 = vmatmul.mubr.bf16.gmra.mrb[0].mxu0 %v789
      %v967 = vpop.f32.mrb[0].mxu0
      %v968 = vadd.f32 0.0, %v967
      %v969 = vpop.f32.mrb[0].mxu0
      %v970 = vpop.f32.mrb[0].mxu0
      %v971 = vadd.f32 0.0, %v970
      %v972 = vpop.f32.mrb[0].mxu0
      %973 = vmatprep.mubr.bf16.mxu0 %v793
      %974 = vmatmul.mubr.bf16.gmra.mrb[0].mxu0 %v792
      %v975 = vpop.f32.mrb[0].mxu0
      %v976 = vadd.f32 0.0, %v975
      %v977 = vpop.f32.mrb[0].mxu0
      %v978 = vpop.f32.mrb[0].mxu0
      %v979 = vadd.f32 0.0, %v978
      %v980 = vpop.f32.mrb[0].mxu0
      %981 = vmatprep.mubr.bf16.mxu0 %v796
      %982 = vmatmul.mubr.bf16.gmra.mrb[0].mxu0 %v795
      %v983 = vpop.f32.mrb[0].mxu0
      %v984 = vadd.f32 0.0, %v983
      %v985 = vpop.f32.mrb[0].mxu0
      %v986 = vpop.f32.mrb[0].mxu0
      %v987 = vadd.f32 0.0, %v986
      %v988 = vpop.f32.mrb[0].mxu0
      %989 = vmatprep.mubr.bf16.mxu0 %v799
      %990 = vmatmul.mubr.bf16.gmra.mrb[0].mxu0 %v798
      %v991 = vpop.f32.mrb[0].mxu0
      %v992 = vadd.f32 0.0, %v991
      %v993 = vpop.f32.mrb[0].mxu0
      %v994 = vpop.f32.mrb[0].mxu0
      %v995 = vadd.f32 0.0, %v994
      %v996 = vpop.f32.mrb[0].mxu0
      %997 = vmatprep.mubr.bf16.mxu0 %v802
      %998 = vmatmul.mubr.bf16.gmra.mrb[0].mxu0 %v801
      %v999 = vpop.f32.mrb[0].mxu0
      %v1000 = vadd.f32 0.0, %v999
      %v1001 = vpop.f32.mrb[0].mxu0
      %v1002 = vpop.f32.mrb[0].mxu0
      %v1003 = vadd.f32 0.0, %v1002
      %v1004 = vpop.f32.mrb[0].mxu0
      %1005 = vmatprep.mubr.bf16.mxu0 %v805
      %1006 = vmatmul.mubr.bf16.gmra.mrb[0].mxu0 %v804
      %v1007 = vpop.f32.mrb[0].mxu0
      %v1008 = vadd.f32 0.0, %v1007
      %v1009 = vpop.f32.mrb[0].mxu0
      %v1010 = vpop.f32.mrb[0].mxu0
      %v1011 = vadd.f32 0.0, %v1010
      %v1012 = vpop.f32.mrb[0].mxu0
      %1013 = vmatprep.mubr.bf16.mxu0 %v808
      %1014 = vmatmul.mubr.bf16.gmra.mrb[0].mxu0 %v807
      %v1015 = vpop.f32.mrb[0].mxu0
      %v1016 = vadd.f32 0.0, %v1015
      %v1017 = vpop.f32.mrb[0].mxu0
      %v1018 = vpop.f32.mrb[0].mxu0
      %v1019 = vadd.f32 0.0, %v1018
      %v1020 = vpop.f32.mrb[0].mxu0
      %1021 = vmatprep.mubr.bf16.mxu0 %v811
      %1022 = vmatmul.mubr.bf16.gmra.mrb[0].mxu0 %v810
      %v1023 = vpop.f32.mrb[0].mxu0
      %v1024 = vadd.f32 0.0, %v1023
      %v1025 = vpop.f32.mrb[0].mxu0
      %v1026 = vpop.f32.mrb[0].mxu0
      %v1027 = vadd.f32 0.0, %v1026
      %v1028 = vpop.f32.mrb[0].mxu0
      %1029 = vmatprep.mubr.bf16.mxu0 %v814
      %1030 = vmatmul.mubr.bf16.gmra.mrb[0].mxu0 %v813
      %v1031 = vpop.f32.mrb[0].mxu0
      %v1032 = vadd.f32 0.0, %v1031
      %v1033 = vpop.f32.mrb[0].mxu0
      %v1034 = vpop.f32.mrb[0].mxu0
      %v1035 = vadd.f32 0.0, %v1034
      %v1036 = vpop.f32.mrb[0].mxu0
      %1037 = vmatprep.mubr.bf16.mxu0 %v817
      %1038 = vmatmul.mubr.bf16.gmra.mrb[0].mxu0 %v816
      %v1039 = vpop.f32.mrb[0].mxu0
      %v1040 = vadd.f32 0.0, %v1039
      %v1041 = vpop.f32.mrb[0].mxu0
      %v1042 = vpop.f32.mrb[0].mxu0
      %v1043 = vadd.f32 0.0, %v1042
      %v1044 = vpop.f32.mrb[0].mxu0
      %1045 = vmatprep.mubr.bf16.mxu0 %v820
      %1046 = vmatmul.mubr.bf16.gmra.mrb[0].mxu0 %v819
      %v1047 = vpop.f32.mrb[0].mxu0
      %v1048 = vadd.f32 0.0, %v1047
      %v1049 = vpop.f32.mrb[0].mxu0
      %v1050 = vpop.f32.mrb[0].mxu0
      %v1051 = vadd.f32 0.0, %v1050
      %v1052 = vpop.f32.mrb[0].mxu0
      %1053 = vmatprep.mubr.bf16.mxu0 %v823
      %1054 = vmatmul.mubr.bf16.gmra.mrb[0].mxu0 %v822
      %v1055 = vpop.f32.mrb[0].mxu0
      %v1056 = vadd.f32 0.0, %v1055
      %v1057 = vpop.f32.mrb[0].mxu0
      %v1058 = vpop.f32.mrb[0].mxu0
      %v1059 = vadd.f32 0.0, %v1058
      %v1060 = vpop.f32.mrb[0].mxu0
      %1061 = vmatprep.mubr.bf16.mxu0 %v826
      %1062 = vmatmul.mubr.bf16.gmra.mrb[0].mxu0 %v825
      %v1063 = vpop.f32.mrb[0].mxu0
      %v1064 = vadd.f32 0.0, %v1063
      %v1065 = vpop.f32.mrb[0].mxu0
      %v1066 = vpop.f32.mrb[0].mxu0
      %v1067 = vadd.f32 0.0, %v1066
      %v1068 = vpop.f32.mrb[0].mxu0
      %1069 = vmatprep.mubr.bf16.mxu0 %v829
      %1070 = vmatmul.mubr.bf16.gmra.mrb[0].mxu0 %v828
      %v1071 = vpop.f32.mrb[0].mxu0
      %v1072 = vadd.f32 0.0, %v1071
      %v1073 = vpop.f32.mrb[0].mxu0
      %v1074 = vpop.f32.mrb[0].mxu0
      %v1075 = vadd.f32 0.0, %v1074
      %v1076 = vpop.f32.mrb[0].mxu0
      %1077 = vmatprep.mubr.bf16.mxu0 %v832
      %1078 = vmatmul.mubr.bf16.gmra.mrb[0].mxu0 %v831
      %v1079 = vpop.f32.mrb[0].mxu0
      %v1080 = vadd.f32 0.0, %v1079
      %v1081 = vpop.f32.mrb[0].mxu0
      %v1082 = vpop.f32.mrb[0].mxu0
      %v1083 = vadd.f32 0.0, %v1082
      %v1084 = vpop.f32.mrb[0].mxu0
      %1085 = vmatprep.mubr.bf16.mxu0 %v835
      %1086 = vmatmul.mubr.bf16.gmra.mrb[0].mxu0 %v834
      %v1087 = vpop.f32.mrb[0].mxu0
      %v1088 = vadd.f32 0.0, %v1087
      %v1089 = vpop.f32.mrb[0].mxu0
      %v1090 = vpop.f32.mrb[0].mxu0
      %v1091 = vadd.f32 0.0, %v1090
      %v1092 = vpop.f32.mrb[0].mxu0
      %1093 = vmatprep.mubr.bf16.mxu0 %v838
      %1094 = vmatmul.mubr.bf16.gmra.mrb[0].mxu0 %v837
      %v1095 = vpop.f32.mrb[0].mxu0
      %v1096 = vadd.f32 0.0, %v1095
      %v1097 = vpop.f32.mrb[0].mxu0
      %v1098 = vpop.f32.mrb[0].mxu0
      %v1099 = vadd.f32 0.0, %v1098
      %v1100 = vpop.f32.mrb[0].mxu0
      %1101 = vmatprep.mubr.bf16.mxu0 %v841
      %1102 = vmatmul.mubr.bf16.gmra.mrb[0].mxu0 %v840
      %v1103 = vpop.f32.mrb[0].mxu0
      %v1104 = vadd.f32 0.0, %v1103
      %v1105 = vpop.f32.mrb[0].mxu0
      %v1106 = vpop.f32.mrb[0].mxu0
      %v1107 = vadd.f32 0.0, %v1106
      %v1108 = vpop.f32.mrb[0].mxu0
      %1109 = vmatprep.mubr.bf16.mxu0 %v844
      %1110 = vmatmul.mubr.bf16.gmra.mrb[0].mxu0 %v843
      %v1111 = vpop.f32.mrb[0].mxu0
      %v1112 = vadd.f32 0.0, %v1111
      %v1113 = vpop.f32.mrb[0].mxu0
      %v1114 = vpop.f32.mrb[0].mxu0
      %v1115 = vadd.f32 0.0, %v1114
      %v1116 = vpop.f32.mrb[0].mxu0
      %1117 = vmatprep.mubr.bf16.mxu0 %v847
      %1118 = vmatmul.mubr.bf16.gmra.mrb[0].mxu0 %v846
      %v1119 = vpop.f32.mrb[0].mxu0
      %v1120 = vadd.f32 0.0, %v1119
      %v1121 = vpop.f32.mrb[0].mxu0
      %v1122 = vpop.f32.mrb[0].mxu0
      %v1123 = vadd.f32 0.0, %v1122
      %v1124 = vpop.f32.mrb[0].mxu0
      %1125 = vmatprep.mubr.bf16.mxu0 %v850
      %1126 = vmatmul.mubr.bf16.gmra.mrb[0].mxu0 %v849
      %v1127 = vpop.f32.mrb[0].mxu0
      %v1128 = vadd.f32 0.0, %v1127
      %v1129 = vpop.f32.mrb[0].mxu0
      %v1130 = vpop.f32.mrb[0].mxu0
      %v1131 = vadd.f32 0.0, %v1130
      %v1132 = vpop.f32.mrb[0].mxu0
      %1133 = vmatprep.mubr.bf16.mxu0 %v853
      %1134 = vmatmul.mubr.bf16.gmra.mrb[0].mxu0 %v852
      %v1135 = vpop.f32.mrb[0].mxu0
      %v1136 = vadd.f32 0.0, %v1135
      %v1137 = vpop.f32.mrb[0].mxu0
      %v1138 = vpop.f32.mrb[0].mxu0
      %v1139 = vadd.f32 0.0, %v1138
      %v1140 = vpop.f32.mrb[0].mxu0
      %1141 = vmatprep.mubr.bf16.mxu0 %v856
      %1142 = vmatmul.mubr.bf16.gmra.mrb[0].mxu0 %v855
      %v1143 = vpop.f32.mrb[0].mxu0
      %v1144 = vadd.f32 0.0, %v1143
      %v1145 = vpop.f32.mrb[0].mxu0
      %v1146 = vpop.f32.mrb[0].mxu0
      %v1147 = vadd.f32 0.0, %v1146
      %v1148 = vpop.f32.mrb[0].mxu0
      %1149 = vmatprep.mubr.bf16.mxu0 %v859
      %1150 = vmatmul.mubr.bf16.gmra.mrb[0].mxu0 %v858
      %v1151 = vpop.f32.mrb[0].mxu0
      %v1152 = vadd.f32 0.0, %v1151
      %v1153 = vpop.f32.mrb[0].mxu0
      %v1154 = vpop.f32.mrb[0].mxu0
      %v1155 = vadd.f32 0.0, %v1154
      %v1156 = vpop.f32.mrb[0].mxu0
      %1157 = vdwg.mxu0
      %1158 = vmatprep.subr.bf16.mxu0 0
      %1159 = vmatpush1.bf16.msra.mxu0 %v541
      %1160 = vmatprep.subr.bf16.mxu0 0
      %1161 = vmatpush1.bf16.msra.mxu0 %v542
      %1162 = vmatprep.subr.bf16.mxu0 0
      %1163 = vmatpush1.bf16.msra.mxu0 %v543
      %1164 = vmatprep.subr.bf16.mxu0 0
      %1165 = vmatpush1.bf16.msra.mxu0 %v544
      %1166 = vmatprep.subr.bf16.mxu0 0
      %1167 = vmatpush1.bf16.msra.mxu0 %v545
      %1168 = vmatprep.subr.bf16.mxu0 0
      %1169 = vmatpush1.bf16.msra.mxu0 %v546
      %1170 = vmatprep.subr.bf16.mxu0 0
      %1171 = vmatpush1.bf16.msra.mxu0 %v547
      %1172 = vmatprep.subr.bf16.mxu0 0
      %1173 = vmatpush1.bf16.msra.mxu0 %v548
      %1174 = vmatprep.subr.bf16.mxu0 0
      %1175 = vmatpush1.bf16.msra.mxu0 0
      %1176 = vmatprep.subr.bf16.mxu0 0
      %1177 = vmatpush1.bf16.msra.mxu0 0
      %1178 = vmatprep.subr.bf16.mxu0 0
      %1179 = vmatpush1.bf16.msra.mxu0 0
      %1180 = vmatprep.subr.bf16.mxu0 0
      %1181 = vmatpush1.bf16.msra.mxu0 0
      %1182 = vmatprep.subr.bf16.mxu0 0
      %1183 = vmatpush1.bf16.msra.mxu0 0
      %1184 = vmatprep.subr.bf16.mxu0 0
      %1185 = vmatpush1.bf16.msra.mxu0 0
      %1186 = vmatprep.subr.bf16.mxu0 0
      %1187 = vmatpush1.bf16.msra.mxu0 0
      %1188 = vmatprep.subr.bf16.mxu0 0
      %1189 = vmatpush1.bf16.msra.mxu0 0
      %1190 = vmatprep.mubr.bf16.mxu0 0
      %1191 = vmatmul.mubr.bf16.gmra.mrb[0].mxu0 %v791
      %v1192 = vpop.f32.mrb[0].mxu0
      %v1193 = vadd.f32 %v968, %v1192
      %v1194 = vpop.f32.mrb[0].mxu0
      %v1195 = vpop.f32.mrb[0].mxu0
      %v1196 = vadd.f32 %v971, %v1195
      %v1197 = vpop.f32.mrb[0].mxu0
      %1198 = vmatprep.mubr.bf16.mxu0 0
      %1199 = vmatmul.mubr.bf16.gmra.mrb[0].mxu0 %v794
      %v1200 = vpop.f32.mrb[0].mxu0
      %v1201 = vadd.f32 %v976, %v1200
      %v1202 = vpop.f32.mrb[0].mxu0
      %v1203 = vpop.f32.mrb[0].mxu0
      %v1204 = vadd.f32 %v979, %v1203
      %v1205 = vpop.f32.mrb[0].mxu0
      %1206 = vmatprep.mubr.bf16.mxu0 0
      %1207 = vmatmul.mubr.bf16.gmra.mrb[0].mxu0 %v797
      %v1208 = vpop.f32.mrb[0].mxu0
      %v1209 = vadd.f32 %v984, %v1208
      %v1210 = vpop.f32.mrb[0].mxu0
      %v1211 = vpop.f32.mrb[0].mxu0
      %v1212 = vadd.f32 %v987, %v1211
      %v1213 = vpop.f32.mrb[0].mxu0
      %1214 = vmatprep.mubr.bf16.mxu0 0
      %1215 = vmatmul.mubr.bf16.gmra.mrb[0].mxu0 %v800
      %v1216 = vpop.f32.mrb[0].mxu0
      %v1217 = vadd.f32 %v992, %v1216
      %v1218 = vpop.f32.mrb[0].mxu0
      %v1219 = vpop.f32.mrb[0].mxu0
      %v1220 = vadd.f32 %v995, %v1219
      %v1221 = vpop.f32.mrb[0].mxu0
      %1222 = vmatprep.mubr.bf16.mxu0 0
      %1223 = vmatmul.mubr.bf16.gmra.mrb[0].mxu0 %v803
      %v1224 = vpop.f32.mrb[0].mxu0
      %v1225 = vadd.f32 %v1000, %v1224
      %v1226 = vpop.f32.mrb[0].mxu0
      %v1227 = vpop.f32.mrb[0].mxu0
      %v1228 = vadd.f32 %v1003, %v1227
      %v1229 = vpop.f32.mrb[0].mxu0
      %1230 = vmatprep.mubr.bf16.mxu0 0
      %1231 = vmatmul.mubr.bf16.gmra.mrb[0].mxu0 %v806
      %v1232 = vpop.f32.mrb[0].mxu0
      %v1233 = vadd.f32 %v1008, %v1232
      %v1234 = vpop.f32.mrb[0].mxu0
      %v1235 = vpop.f32.mrb[0].mxu0
      %v1236 = vadd.f32 %v1011, %v1235
      %v1237 = vpop.f32.mrb[0].mxu0
      %1238 = vmatprep.mubr.bf16.mxu0 0
      %1239 = vmatmul.mubr.bf16.gmra.mrb[0].mxu0 %v809
      %v1240 = vpop.f32.mrb[0].mxu0
      %v1241 = vadd.f32 %v1016, %v1240
      %v1242 = vpop.f32.mrb[0].mxu0
      %v1243 = vpop.f32.mrb[0].mxu0
      %v1244 = vadd.f32 %v1019, %v1243
      %v1245 = vpop.f32.mrb[0].mxu0
      %1246 = vmatprep.mubr.bf16.mxu0 0
      %1247 = vmatmul.mubr.bf16.gmra.mrb[0].mxu0 %v812
      %v1248 = vpop.f32.mrb[0].mxu0
      %v1249 = vadd.f32 %v1024, %v1248
      %v1250 = vpop.f32.mrb[0].mxu0
      %v1251 = vpop.f32.mrb[0].mxu0
      %v1252 = vadd.f32 %v1027, %v1251
      %v1253 = vpop.f32.mrb[0].mxu0
      %1254 = vmatprep.mubr.bf16.mxu0 0
      %1255 = vmatmul.mubr.bf16.gmra.mrb[0].mxu0 %v815
      %v1256 = vpop.f32.mrb[0].mxu0
      %v1257 = vadd.f32 %v1032, %v1256
      %v1258 = vpop.f32.mrb[0].mxu0
      %v1259 = vpop.f32.mrb[0].mxu0
      %v1260 = vadd.f32 %v1035, %v1259
      %v1261 = vpop.f32.mrb[0].mxu0
      %1262 = vmatprep.mubr.bf16.mxu0 0
      %1263 = vmatmul.mubr.bf16.gmra.mrb[0].mxu0 %v818
      %v1264 = vpop.f32.mrb[0].mxu0
      %v1265 = vadd.f32 %v1040, %v1264
      %v1266 = vpop.f32.mrb[0].mxu0
      %v1267 = vpop.f32.mrb[0].mxu0
      %v1268 = vadd.f32 %v1043, %v1267
      %v1269 = vpop.f32.mrb[0].mxu0
      %1270 = vmatprep.mubr.bf16.mxu0 0
      %1271 = vmatmul.mubr.bf16.gmra.mrb[0].mxu0 %v821
      %v1272 = vpop.f32.mrb[0].mxu0
      %v1273 = vadd.f32 %v1048, %v1272
      %v1274 = vpop.f32.mrb[0].mxu0
      %v1275 = vpop.f32.mrb[0].mxu0
      %v1276 = vadd.f32 %v1051, %v1275
      %v1277 = vpop.f32.mrb[0].mxu0
      %1278 = vmatprep.mubr.bf16.mxu0 0
      %1279 = vmatmul.mubr.bf16.gmra.mrb[0].mxu0 %v824
      %v1280 = vpop.f32.mrb[0].mxu0
      %v1281 = vadd.f32 %v1056, %v1280
      %v1282 = vpop.f32.mrb[0].mxu0
      %v1283 = vpop.f32.mrb[0].mxu0
      %v1284 = vadd.f32 %v1059, %v1283
      %v1285 = vpop.f32.mrb[0].mxu0
      %1286 = vmatprep.mubr.bf16.mxu0 0
      %1287 = vmatmul.mubr.bf16.gmra.mrb[0].mxu0 %v827
      %v1288 = vpop.f32.mrb[0].mxu0
      %v1289 = vadd.f32 %v1064, %v1288
      %v1290 = vpop.f32.mrb[0].mxu0
      %v1291 = vpop.f32.mrb[0].mxu0
      %v1292 = vadd.f32 %v1067, %v1291
      %v1293 = vpop.f32.mrb[0].mxu0
      %1294 = vmatprep.mubr.bf16.mxu0 0
      %1295 = vmatmul.mubr.bf16.gmra.mrb[0].mxu0 %v830
      %v1296 = vpop.f32.mrb[0].mxu0
      %v1297 = vadd.f32 %v1072, %v1296
      %v1298 = vpop.f32.mrb[0].mxu0
      %v1299 = vpop.f32.mrb[0].mxu0
      %v1300 = vadd.f32 %v1075, %v1299
      %v1301 = vpop.f32.mrb[0].mxu0
      %1302 = vmatprep.mubr.bf16.mxu0 0
      %1303 = vmatmul.mubr.bf16.gmra.mrb[0].mxu0 %v833
      %v1304 = vpop.f32.mrb[0].mxu0
      %v1305 = vadd.f32 %v1080, %v1304
      %v1306 = vpop.f32.mrb[0].mxu0
      %v1307 = vpop.f32.mrb[0].mxu0
      %v1308 = vadd.f32 %v1083, %v1307
      %v1309 = vpop.f32.mrb[0].mxu0
      %1310 = vmatprep.mubr.bf16.mxu0 0
      %1311 = vmatmul.mubr.bf16.gmra.mrb[0].mxu0 %v836
      %v1312 = vpop.f32.mrb[0].mxu0
      %v1313 = vadd.f32 %v1088, %v1312
      %v1314 = vpop.f32.mrb[0].mxu0
      %v1315 = vpop.f32.mrb[0].mxu0
      %v1316 = vadd.f32 %v1091, %v1315
      %v1317 = vpop.f32.mrb[0].mxu0
      %1318 = vmatprep.mubr.bf16.mxu0 0
      %1319 = vmatmul.mubr.bf16.gmra.mrb[0].mxu0 %v839
      %v1320 = vpop.f32.mrb[0].mxu0
      %v1321 = vadd.f32 %v1096, %v1320
      %v1322 = vpop.f32.mrb[0].mxu0
      %v1323 = vpop.f32.mrb[0].mxu0
      %v1324 = vadd.f32 %v1099, %v1323
      %v1325 = vpop.f32.mrb[0].mxu0
      %1326 = vmatprep.mubr.bf16.mxu0 0
      %1327 = vmatmul.mubr.bf16.gmra.mrb[0].mxu0 %v842
      %v1328 = vpop.f32.mrb[0].mxu0
      %v1329 = vadd.f32 %v1104, %v1328
      %v1330 = vpop.f32.mrb[0].mxu0
      %v1331 = vpop.f32.mrb[0].mxu0
      %v1332 = vadd.f32 %v1107, %v1331
      %v1333 = vpop.f32.mrb[0].mxu0
      %1334 = vmatprep.mubr.bf16.mxu0 0
      %1335 = vmatmul.mubr.bf16.gmra.mrb[0].mxu0 %v845
      %v1336 = vpop.f32.mrb[0].mxu0
      %v1337 = vadd.f32 %v1112, %v1336
      %v1338 = vpop.f32.mrb[0].mxu0
      %v1339 = vpop.f32.mrb[0].mxu0
      %v1340 = vadd.f32 %v1115, %v1339
      %v1341 = vpop.f32.mrb[0].mxu0
      %1342 = vmatprep.mubr.bf16.mxu0 0
      %1343 = vmatmul.mubr.bf16.gmra.mrb[0].mxu0 %v848
      %v1344 = vpop.f32.mrb[0].mxu0
      %v1345 = vadd.f32 %v1120, %v1344
      %v1346 = vpop.f32.mrb[0].mxu0
      %v1347 = vpop.f32.mrb[0].mxu0
      %v1348 = vadd.f32 %v1123, %v1347
      %v1349 = vpop.f32.mrb[0].mxu0
      %1350 = vmatprep.mubr.bf16.mxu0 0
      %1351 = vmatmul.mubr.bf16.gmra.mrb[0].mxu0 %v851
      %v1352 = vpop.f32.mrb[0].mxu0
      %v1353 = vadd.f32 %v1128, %v1352
      %v1354 = vpop.f32.mrb[0].mxu0
      %v1355 = vpop.f32.mrb[0].mxu0
      %v1356 = vadd.f32 %v1131, %v1355
      %v1357 = vpop.f32.mrb[0].mxu0
      %1358 = vmatprep.mubr.bf16.mxu0 0
      %1359 = vmatmul.mubr.bf16.gmra.mrb[0].mxu0 %v854
      %v1360 = vpop.f32.mrb[0].mxu0
      %v1361 = vadd.f32 %v1136, %v1360
      %v1362 = vpop.f32.mrb[0].mxu0
      %v1363 = vpop.f32.mrb[0].mxu0
      %v1364 = vadd.f32 %v1139, %v1363
      %v1365 = vpop.f32.mrb[0].mxu0
      %1366 = vmatprep.mubr.bf16.mxu0 0
      %1367 = vmatmul.mubr.bf16.gmra.mrb[0].mxu0 %v857
      %v1368 = vpop.f32.mrb[0].mxu0
      %v1369 = vadd.f32 %v1144, %v1368
      %v1370 = vpop.f32.mrb[0].mxu0
      %v1371 = vpop.f32.mrb[0].mxu0
      %v1372 = vadd.f32 %v1147, %v1371
      %v1373 = vpop.f32.mrb[0].mxu0
      %1374 = vmatprep.mubr.bf16.mxu0 0
      %1375 = vmatmul.mubr.bf16.gmra.mrb[0].mxu0 %v860
      %v1376 = vpop.f32.mrb[0].mxu0
      %v1377 = vadd.f32 %v1152, %v1376
      %v1378 = vpop.f32.mrb[0].mxu0
      %v1379 = vpop.f32.mrb[0].mxu0
      %v1380 = vadd.f32 %v1155, %v1379
      %v1381 = vpop.f32.mrb[0].mxu0
      %1382 = vdwg.mxu0
      %p1383 = scmp.eq.s32.totalorder %s20, 0
      // Predicated region
      $region33: #{hyperconv_forward.1} parent=27 // pred_check
        %p1384 = pneg %p1383
      $region34: #{hyperconv_forward.1} parent=27 // pred_check_branch
        %1386 = sbr.rel (%p1384) target = $region36
      $region35: #{hyperconv_forward.1} parent=27 // pred_region
        %1387 = vst [vmem:[#allocation4] sm:$0xff] %v1193
        %1388 = vst [vmem:[#allocation4 + $0x8] sm:$0xff] %v1196
        %1389 = vst [vmem:[#allocation4 + $0x10] sm:$0xff] %v1201
        %1390 = vst [vmem:[#allocation4 + $0x18] sm:$0xff] %v1204
        %1391 = vst [vmem:[#allocation4 + $0x20] sm:$0xff] %v1209
        %1392 = vst [vmem:[#allocation4 + $0x28] sm:$0xff] %v1212
        %1393 = vst [vmem:[#allocation4 + $0x30] sm:$0xff] %v1217
        %1394 = vst [vmem:[#allocation4 + $0x38] sm:$0xff] %v1220
        %1395 = vst [vmem:[#allocation4 + $0x40] sm:$0xff] %v1225
        %1396 = vst [vmem:[#allocation4 + $0x48] sm:$0xff] %v1228
        %1397 = vst [vmem:[#allocation4 + $0x50] sm:$0xff] %v1233
        %1398 = vst [vmem:[#allocation4 + $0x58] sm:$0xff] %v1236
        %1399 = vst [vmem:[#allocation4 + $0x60] sm:$0xff] %v1241
        %1400 = vst [vmem:[#allocation4 + $0x68] sm:$0xff] %v1244
        %1401 = vst [vmem:[#allocation4 + $0x70] sm:$0xff] %v1249
        %1402 = vst [vmem:[#allocation4 + $0x78] sm:$0xff] %v1252
        %1403 = vst [vmem:[#allocation4 + $0x80] sm:$0xff] %v1257
        %1404 = vst [vmem:[#allocation4 + $0x88] sm:$0xff] %v1260
        %1405 = vst [vmem:[#allocation4 + $0x90] sm:$0xff] %v1265
        %1406 = vst [vmem:[#allocation4 + $0x98] sm:$0xff] %v1268
        %1407 = vst [vmem:[#allocation4 + $0xa0] sm:$0xff] %v1273
        %1408 = vst [vmem:[#allocation4 + $0xa8] sm:$0xff] %v1276
        %1409 = vst [vmem:[#allocation4 + $0xb0] sm:$0xff] %v1281
        %1410 = vst [vmem:[#allocation4 + $0xb8] sm:$0xff] %v1284
        %1411 = vst [vmem:[#allocation4 + $0xc0] sm:$0xff] %v1289
        %1412 = vst [vmem:[#allocation4 + $0xc8] sm:$0xff] %v1292
        %1413 = vst [vmem:[#allocation4 + $0xd0] sm:$0xff] %v1297
        %1414 = vst [vmem:[#allocation4 + $0xd8] sm:$0xff] %v1300
        %1415 = vst [vmem:[#allocation4 + $0xe0] sm:$0xff] %v1305
        %1416 = vst [vmem:[#allocation4 + $0xe8] sm:$0xff] %v1308
        %1417 = vst [vmem:[#allocation4 + $0xf0] sm:$0xff] %v1313
        %1418 = vst [vmem:[#allocation4 + $0xf8] sm:$0xff] %v1316
        %1419 = vst [vmem:[#allocation4 + $0x100] sm:$0xff] %v1321
        %1420 = vst [vmem:[#allocation4 + $0x108] sm:$0xff] %v1324
        %1421 = vst [vmem:[#allocation4 + $0x110] sm:$0xff] %v1329
        %1422 = vst [vmem:[#allocation4 + $0x118] sm:$0xff] %v1332
        %1423 = vst [vmem:[#allocation4 + $0x120] sm:$0xff] %v1337
        %1424 = vst [vmem:[#allocation4 + $0x128] sm:$0xff] %v1340
        %1425 = vst [vmem:[#allocation4 + $0x130] sm:$0xff] %v1345
        %1426 = vst [vmem:[#allocation4 + $0x138] sm:$0xff] %v1348
        %1427 = vst [vmem:[#allocation4 + $0x140] sm:$0xff] %v1353
        %1428 = vst [vmem:[#allocation4 + $0x148] sm:$0xff] %v1356
        %1429 = vst [vmem:[#allocation4 + $0x150] sm:$0xff] %v1361
        %1430 = vst [vmem:[#allocation4 + $0x158] sm:$0xff] %v1364
        %1431 = vst [vmem:[#allocation4 + $0x160] sm:$0xff] %v1369
        %1432 = vst [vmem:[#allocation4 + $0x168] sm:$0xff] %v1372
        %1433 = vst [vmem:[#allocation4 + $0x170] sm:$0xff] %v1377
        %1434 = vst [vmem:[#allocation4 + $0x178] sm:$0xff] %v1380
      $region36: #{hyperconv_forward.1} parent=27 // pred_fallthru
        _
      %p1435 = scmp.ne.s32.totalorder %s20, 0
      // Predicated region
      $region37: #{hyperconv_forward.1} parent=27 // pred_check
        %p1436 = pneg %p1435
      $region38: #{hyperconv_forward.1} parent=27 // pred_check_branch
        %1438 = sbr.rel (%p1436) target = $region40
      $region39: #{hyperconv_forward.1} parent=27 // pred_region
        %v1439 = vld [vmem:[#allocation4] sm:$0xff]
        %v1440 = vld [vmem:[#allocation4 + $0x8] sm:$0xff]
        %v1441 = vld [vmem:[#allocation4 + $0x10] sm:$0xff]
        %v1442 = vld [vmem:[#allocation4 + $0x18] sm:$0xff]
        %v1443 = vld [vmem:[#allocation4 + $0x20] sm:$0xff]
        %v1444 = vld [vmem:[#allocation4 + $0x28] sm:$0xff]
        %v1445 = vld [vmem:[#allocation4 + $0x30] sm:$0xff]
        %v1446 = vld [vmem:[#allocation4 + $0x38] sm:$0xff]
        %v1447 = vld [vmem:[#allocation4 + $0x40] sm:$0xff]
        %v1448 = vld [vmem:[#allocation4 + $0x48] sm:$0xff]
        %v1449 = vld [vmem:[#allocation4 + $0x50] sm:$0xff]
        %v1450 = vld [vmem:[#allocation4 + $0x58] sm:$0xff]
        %v1451 = vld [vmem:[#allocation4 + $0x60] sm:$0xff]
        %v1452 = vld [vmem:[#allocation4 + $0x68] sm:$0xff]
        %v1453 = vld [vmem:[#allocation4 + $0x70] sm:$0xff]
        %v1454 = vld [vmem:[#allocation4 + $0x78] sm:$0xff]
        %v1455 = vld [vmem:[#allocation4 + $0x80] sm:$0xff]
        %v1456 = vld [vmem:[#allocation4 + $0x88] sm:$0xff]
        %v1457 = vld [vmem:[#allocation4 + $0x90] sm:$0xff]
        %v1458 = vld [vmem:[#allocation4 + $0x98] sm:$0xff]
        %v1459 = vld [vmem:[#allocation4 + $0xa0] sm:$0xff]
        %v1460 = vld [vmem:[#allocation4 + $0xa8] sm:$0xff]
        %v1461 = vld [vmem:[#allocation4 + $0xb0] sm:$0xff]
        %v1462 = vld [vmem:[#allocation4 + $0xb8] sm:$0xff]
        %v1463 = vld [vmem:[#allocation4 + $0xc0] sm:$0xff]
        %v1464 = vld [vmem:[#allocation4 + $0xc8] sm:$0xff]
        %v1465 = vld [vmem:[#allocation4 + $0xd0] sm:$0xff]
        %v1466 = vld [vmem:[#allocation4 + $0xd8] sm:$0xff]
        %v1467 = vld [vmem:[#allocation4 + $0xe0] sm:$0xff]
        %v1468 = vld [vmem:[#allocation4 + $0xe8] sm:$0xff]
        %v1469 = vld [vmem:[#allocation4 + $0xf0] sm:$0xff]
        %v1470 = vld [vmem:[#allocation4 + $0xf8] sm:$0xff]
        %v1471 = vld [vmem:[#allocation4 + $0x100] sm:$0xff]
        %v1472 = vld [vmem:[#allocation4 + $0x108] sm:$0xff]
        %v1473 = vld [vmem:[#allocation4 + $0x110] sm:$0xff]
        %v1474 = vld [vmem:[#allocation4 + $0x118] sm:$0xff]
        %v1475 = vld [vmem:[#allocation4 + $0x120] sm:$0xff]
        %v1476 = vld [vmem:[#allocation4 + $0x128] sm:$0xff]
        %v1477 = vld [vmem:[#allocation4 + $0x130] sm:$0xff]
        %v1478 = vld [vmem:[#allocation4 + $0x138] sm:$0xff]
        %v1479 = vld [vmem:[#allocation4 + $0x140] sm:$0xff]
        %v1480 = vld [vmem:[#allocation4 + $0x148] sm:$0xff]
        %v1481 = vld [vmem:[#allocation4 + $0x150] sm:$0xff]
        %v1482 = vld [vmem:[#allocation4 + $0x158] sm:$0xff]
        %v1483 = vld [vmem:[#allocation4 + $0x160] sm:$0xff]
        %v1484 = vld [vmem:[#allocation4 + $0x168] sm:$0xff]
        %v1485 = vld [vmem:[#allocation4 + $0x170] sm:$0xff]
        %v1486 = vld [vmem:[#allocation4 + $0x178] sm:$0xff]
        %v1487 = vadd.f32 %v1439, %v1193
        %v1488 = vadd.f32 %v1440, %v1196
        %v1489 = vadd.f32 %v1441, %v1201
        %v1490 = vadd.f32 %v1442, %v1204
        %v1491 = vadd.f32 %v1443, %v1209
        %v1492 = vadd.f32 %v1444, %v1212
        %v1493 = vadd.f32 %v1445, %v1217
        %v1494 = vadd.f32 %v1446, %v1220
        %v1495 = vadd.f32 %v1447, %v1225
        %v1496 = vadd.f32 %v1448, %v1228
        %v1497 = vadd.f32 %v1449, %v1233
        %v1498 = vadd.f32 %v1450, %v1236
        %v1499 = vadd.f32 %v1451, %v1241
        %v1500 = vadd.f32 %v1452, %v1244
        %v1501 = vadd.f32 %v1453, %v1249
        %v1502 = vadd.f32 %v1454, %v1252
        %v1503 = vadd.f32 %v1455, %v1257
        %v1504 = vadd.f32 %v1456, %v1260
        %v1505 = vadd.f32 %v1457, %v1265
        %v1506 = vadd.f32 %v1458, %v1268
        %v1507 = vadd.f32 %v1459, %v1273
        %v1508 = vadd.f32 %v1460, %v1276
        %v1509 = vadd.f32 %v1461, %v1281
        %v1510 = vadd.f32 %v1462, %v1284
        %v1511 = vadd.f32 %v1463, %v1289
        %v1512 = vadd.f32 %v1464, %v1292
        %v1513 = vadd.f32 %v1465, %v1297
        %v1514 = vadd.f32 %v1466, %v1300
        %v1515 = vadd.f32 %v1467, %v1305
        %v1516 = vadd.f32 %v1468, %v1308
        %v1517 = vadd.f32 %v1469, %v1313
        %v1518 = vadd.f32 %v1470, %v1316
        %v1519 = vadd.f32 %v1471, %v1321
        %v1520 = vadd.f32 %v1472, %v1324
        %v1521 = vadd.f32 %v1473, %v1329
        %v1522 = vadd.f32 %v1474, %v1332
        %v1523 = vadd.f32 %v1475, %v1337
        %v1524 = vadd.f32 %v1476, %v1340
        %v1525 = vadd.f32 %v1477, %v1345
        %v1526 = vadd.f32 %v1478, %v1348
        %v1527 = vadd.f32 %v1479, %v1353
        %v1528 = vadd.f32 %v1480, %v1356
        %v1529 = vadd.f32 %v1481, %v1361
        %v1530 = vadd.f32 %v1482, %v1364
        %v1531 = vadd.f32 %v1483, %v1369
        %v1532 = vadd.f32 %v1484, %v1372
        %v1533 = vadd.f32 %v1485, %v1377
        %v1534 = vadd.f32 %v1486, %v1380
        %1535 = vst [vmem:[#allocation4] sm:$0xff] %v1487
        %1536 = vst [vmem:[#allocation4 + $0x8] sm:$0xff] %v1488
        %1537 = vst [vmem:[#allocation4 + $0x10] sm:$0xff] %v1489
        %1538 = vst [vmem:[#allocation4 + $0x18] sm:$0xff] %v1490
        %1539 = vst [vmem:[#allocation4 + $0x20] sm:$0xff] %v1491
        %1540 = vst [vmem:[#allocation4 + $0x28] sm:$0xff] %v1492
        %1541 = vst [vmem:[#allocation4 + $0x30] sm:$0xff] %v1493
        %1542 = vst [vmem:[#allocation4 + $0x38] sm:$0xff] %v1494
        %1543 = vst [vmem:[#allocation4 + $0x40] sm:$0xff] %v1495
        %1544 = vst [vmem:[#allocation4 + $0x48] sm:$0xff] %v1496
        %1545 = vst [vmem:[#allocation4 + $0x50] sm:$0xff] %v1497
        %1546 = vst [vmem:[#allocation4 + $0x58] sm:$0xff] %v1498
        %1547 = vst [vmem:[#allocation4 + $0x60] sm:$0xff] %v1499
        %1548 = vst [vmem:[#allocation4 + $0x68] sm:$0xff] %v1500
        %1549 = vst [vmem:[#allocation4 + $0x70] sm:$0xff] %v1501
        %1550 = vst [vmem:[#allocation4 + $0x78] sm:$0xff] %v1502
        %1551 = vst [vmem:[#allocation4 + $0x80] sm:$0xff] %v1503
        %1552 = vst [vmem:[#allocation4 + $0x88] sm:$0xff] %v1504
        %1553 = vst [vmem:[#allocation4 + $0x90] sm:$0xff] %v1505
        %1554 = vst [vmem:[#allocation4 + $0x98] sm:$0xff] %v1506
        %1555 = vst [vmem:[#allocation4 + $0xa0] sm:$0xff] %v1507
        %1556 = vst [vmem:[#allocation4 + $0xa8] sm:$0xff] %v1508
        %1557 = vst [vmem:[#allocation4 + $0xb0] sm:$0xff] %v1509
        %1558 = vst [vmem:[#allocation4 + $0xb8] sm:$0xff] %v1510
        %1559 = vst [vmem:[#allocation4 + $0xc0] sm:$0xff] %v1511
        %1560 = vst [vmem:[#allocation4 + $0xc8] sm:$0xff] %v1512
        %1561 = vst [vmem:[#allocation4 + $0xd0] sm:$0xff] %v1513
        %1562 = vst [vmem:[#allocation4 + $0xd8] sm:$0xff] %v1514
        %1563 = vst [vmem:[#allocation4 + $0xe0] sm:$0xff] %v1515
        %1564 = vst [vmem:[#allocation4 + $0xe8] sm:$0xff] %v1516
        %1565 = vst [vmem:[#allocation4 + $0xf0] sm:$0xff] %v1517
        %1566 = vst [vmem:[#allocation4 + $0xf8] sm:$0xff] %v1518
        %1567 = vst [vmem:[#allocation4 + $0x100] sm:$0xff] %v1519
        %1568 = vst [vmem:[#allocation4 + $0x108] sm:$0xff] %v1520
        %1569 = vst [vmem:[#allocation4 + $0x110] sm:$0xff] %v1521
        %1570 = vst [vmem:[#allocation4 + $0x118] sm:$0xff] %v1522
        %1571 = vst [vmem:[#allocation4 + $0x120] sm:$0xff] %v1523
        %1572 = vst [vmem:[#allocation4 + $0x128] sm:$0xff] %v1524
        %1573 = vst [vmem:[#allocation4 + $0x130] sm:$0xff] %v1525
        %1574 = vst [vmem:[#allocation4 + $0x138] sm:$0xff] %v1526
        %1575 = vst [vmem:[#allocation4 + $0x140] sm:$0xff] %v1527
        %1576 = vst [vmem:[#allocation4 + $0x148] sm:$0xff] %v1528
        %1577 = vst [vmem:[#allocation4 + $0x150] sm:$0xff] %v1529
        %1578 = vst [vmem:[#allocation4 + $0x158] sm:$0xff] %v1530
        %1579 = vst [vmem:[#allocation4 + $0x160] sm:$0xff] %v1531
        %1580 = vst [vmem:[#allocation4 + $0x168] sm:$0xff] %v1532
        %1581 = vst [vmem:[#allocation4 + $0x170] sm:$0xff] %v1533
        %1582 = vst [vmem:[#allocation4 + $0x178] sm:$0xff] %v1534
      $region40: #{hyperconv_forward.1} parent=27 // pred_fallthru
        _
      // Predicated region
      $region41: #{hyperconv_forward.1} parent=27 // pred_check
        %p1583 = pneg %p1383
      $region42: #{hyperconv_forward.1} parent=27 // pred_check_branch
        %1585 = sbr.rel (%p1583) target = $region44
      $region43: #{hyperconv_forward.1} parent=27 // pred_region
        %v1586 = vld [vmem:[#allocation4] sm:$0xff]
        %v1587 = vld [vmem:[#allocation4 + $0x8] sm:$0xff]
        %v1588 = vld [vmem:[#allocation4 + $0x10] sm:$0xff]
        %v1589 = vld [vmem:[#allocation4 + $0x18] sm:$0xff]
        %v1590 = vld [vmem:[#allocation4 + $0x20] sm:$0xff]
        %v1591 = vld [vmem:[#allocation4 + $0x28] sm:$0xff]
        %v1592 = vld [vmem:[#allocation4 + $0x30] sm:$0xff]
        %v1593 = vld [vmem:[#allocation4 + $0x38] sm:$0xff]
        %v1594 = vld [vmem:[#allocation4 + $0x40] sm:$0xff]
        %v1595 = vld [vmem:[#allocation4 + $0x48] sm:$0xff]
        %v1596 = vld [vmem:[#allocation4 + $0x50] sm:$0xff]
        %v1597 = vld [vmem:[#allocation4 + $0x58] sm:$0xff]
        %v1598 = vld [vmem:[#allocation4 + $0x60] sm:$0xff]
        %v1599 = vld [vmem:[#allocation4 + $0x68] sm:$0xff]
        %v1600 = vld [vmem:[#allocation4 + $0x70] sm:$0xff]
        %v1601 = vld [vmem:[#allocation4 + $0x78] sm:$0xff]
        %v1602 = vld [vmem:[#allocation4 + $0x80] sm:$0xff]
        %v1603 = vld [vmem:[#allocation4 + $0x88] sm:$0xff]
        %v1604 = vld [vmem:[#allocation4 + $0x90] sm:$0xff]
        %v1605 = vld [vmem:[#allocation4 + $0x98] sm:$0xff]
        %v1606 = vld [vmem:[#allocation4 + $0xa0] sm:$0xff]
        %v1607 = vld [vmem:[#allocation4 + $0xa8] sm:$0xff]
        %v1608 = vld [vmem:[#allocation4 + $0xb0] sm:$0xff]
        %v1609 = vld [vmem:[#allocation4 + $0xb8] sm:$0xff]
        %v1610 = vld [vmem:[#allocation4 + $0xc0] sm:$0xff]
        %v1611 = vld [vmem:[#allocation4 + $0xc8] sm:$0xff]
        %v1612 = vld [vmem:[#allocation4 + $0xd0] sm:$0xff]
        %v1613 = vld [vmem:[#allocation4 + $0xd8] sm:$0xff]
        %v1614 = vld [vmem:[#allocation4 + $0xe0] sm:$0xff]
        %v1615 = vld [vmem:[#allocation4 + $0xe8] sm:$0xff]
        %v1616 = vld [vmem:[#allocation4 + $0xf0] sm:$0xff]
        %v1617 = vld [vmem:[#allocation4 + $0xf8] sm:$0xff]
        %v1618 = vld [vmem:[#allocation4 + $0x100] sm:$0xff]
        %v1619 = vld [vmem:[#allocation4 + $0x108] sm:$0xff]
        %v1620 = vld [vmem:[#allocation4 + $0x110] sm:$0xff]
        %v1621 = vld [vmem:[#allocation4 + $0x118] sm:$0xff]
        %v1622 = vld [vmem:[#allocation4 + $0x120] sm:$0xff]
        %v1623 = vld [vmem:[#allocation4 + $0x128] sm:$0xff]
        %v1624 = vld [vmem:[#allocation4 + $0x130] sm:$0xff]
        %v1625 = vld [vmem:[#allocation4 + $0x138] sm:$0xff]
        %v1626 = vld [vmem:[#allocation4 + $0x140] sm:$0xff]
        %v1627 = vld [vmem:[#allocation4 + $0x148] sm:$0xff]
        %v1628 = vld [vmem:[#allocation4 + $0x150] sm:$0xff]
        %v1629 = vld [vmem:[#allocation4 + $0x158] sm:$0xff]
        %v1630 = vld [vmem:[#allocation4 + $0x160] sm:$0xff]
        %v1631 = vld [vmem:[#allocation4 + $0x168] sm:$0xff]
        %v1632 = vld [vmem:[#allocation4 + $0x170] sm:$0xff]
        %v1633 = vld [vmem:[#allocation4 + $0x178] sm:$0xff]
        %s1634 = scalar_lea.vmem [#allocation3], %s253
        %v1635 = vld [vmem:[%s1634] sm:$0xff]
        %v1636 = vld [vmem:[%s1634 + $0x8] sm:$0xff]
        %v1637 = vld [vmem:[%s1634 + $0x10] sm:$0xff]
        %v1638 = vld [vmem:[%s1634 + $0x18] sm:$0xff]
        %v1639 = vld [vmem:[%s1634 + $0x20] sm:$0xff]
        %v1640 = vld [vmem:[%s1634 + $0x28] sm:$0xff]
        %v1641 = vld [vmem:[%s1634 + $0x30] sm:$0xff]
        %v1642 = vld [vmem:[%s1634 + $0x38] sm:$0xff]
        %v1643 = vld [vmem:[%s1634 + $0x40] sm:$0xff]
        %v1644 = vld [vmem:[%s1634 + $0x48] sm:$0xff]
        %v1645 = vld [vmem:[%s1634 + $0x50] sm:$0xff]
        %v1646 = vld [vmem:[%s1634 + $0x58] sm:$0xff]
        %v1647 = vld [vmem:[%s1634 + $0x60] sm:$0xff]
        %v1648 = vld [vmem:[%s1634 + $0x68] sm:$0xff]
        %v1649 = vld [vmem:[%s1634 + $0x70] sm:$0xff]
        %v1650 = vld [vmem:[%s1634 + $0x78] sm:$0xff]
        %v1651 = vld [vmem:[%s1634 + $0x80] sm:$0xff]
        %v1652 = vld [vmem:[%s1634 + $0x88] sm:$0xff]
        %v1653 = vld [vmem:[%s1634 + $0x90] sm:$0xff]
        %v1654 = vld [vmem:[%s1634 + $0x98] sm:$0xff]
        %v1655 = vld [vmem:[%s1634 + $0xa0] sm:$0xff]
        %v1656 = vld [vmem:[%s1634 + $0xa8] sm:$0xff]
        %v1657 = vld [vmem:[%s1634 + $0xb0] sm:$0xff]
        %v1658 = vld [vmem:[%s1634 + $0xb8] sm:$0xff]
        %v1659 = vld [vmem:[%s1634 + $0xc0] sm:$0xff]
        %v1660 = vld [vmem:[%s1634 + $0xc8] sm:$0xff]
        %v1661 = vld [vmem:[%s1634 + $0xd0] sm:$0xff]
        %v1662 = vld [vmem:[%s1634 + $0xd8] sm:$0xff]
        %v1663 = vld [vmem:[%s1634 + $0xe0] sm:$0xff]
        %v1664 = vld [vmem:[%s1634 + $0xe8] sm:$0xff]
        %v1665 = vld [vmem:[%s1634 + $0xf0] sm:$0xff]
        %v1666 = vld [vmem:[%s1634 + $0xf8] sm:$0xff]
        %v1667 = vld [vmem:[%s1634 + $0x100] sm:$0xff]
        %v1668 = vld [vmem:[%s1634 + $0x108] sm:$0xff]
        %v1669 = vld [vmem:[%s1634 + $0x110] sm:$0xff]
        %v1670 = vld [vmem:[%s1634 + $0x118] sm:$0xff]
        %v1671 = vld [vmem:[%s1634 + $0x120] sm:$0xff]
        %v1672 = vld [vmem:[%s1634 + $0x128] sm:$0xff]
        %v1673 = vld [vmem:[%s1634 + $0x130] sm:$0xff]
        %v1674 = vld [vmem:[%s1634 + $0x138] sm:$0xff]
        %v1675 = vld [vmem:[%s1634 + $0x140] sm:$0xff]
        %v1676 = vld [vmem:[%s1634 + $0x148] sm:$0xff]
        %v1677 = vld [vmem:[%s1634 + $0x150] sm:$0xff]
        %v1678 = vld [vmem:[%s1634 + $0x158] sm:$0xff]
        %v1679 = vld [vmem:[%s1634 + $0x160] sm:$0xff]
        %v1680 = vld [vmem:[%s1634 + $0x168] sm:$0xff]
        %v1681 = vld [vmem:[%s1634 + $0x170] sm:$0xff]
        %v1682 = vld [vmem:[%s1634 + $0x178] sm:$0xff]
        %v1683 = vadd.f32 %v1635, %v1586
        %v1684 = vadd.f32 %v1636, %v1587
        %v1685 = vadd.f32 %v1637, %v1588
        %v1686 = vadd.f32 %v1638, %v1589
        %v1687 = vadd.f32 %v1639, %v1590
        %v1688 = vadd.f32 %v1640, %v1591
        %v1689 = vadd.f32 %v1641, %v1592
        %v1690 = vadd.f32 %v1642, %v1593
        %v1691 = vadd.f32 %v1643, %v1594
        %v1692 = vadd.f32 %v1644, %v1595
        %v1693 = vadd.f32 %v1645, %v1596
        %v1694 = vadd.f32 %v1646, %v1597
        %v1695 = vadd.f32 %v1647, %v1598
        %v1696 = vadd.f32 %v1648, %v1599
        %v1697 = vadd.f32 %v1649, %v1600
        %v1698 = vadd.f32 %v1650, %v1601
        %v1699 = vadd.f32 %v1651, %v1602
        %v1700 = vadd.f32 %v1652, %v1603
        %v1701 = vadd.f32 %v1653, %v1604
        %v1702 = vadd.f32 %v1654, %v1605
        %v1703 = vadd.f32 %v1655, %v1606
        %v1704 = vadd.f32 %v1656, %v1607
        %v1705 = vadd.f32 %v1657, %v1608
        %v1706 = vadd.f32 %v1658, %v1609
        %v1707 = vadd.f32 %v1659, %v1610
        %v1708 = vadd.f32 %v1660, %v1611
        %v1709 = vadd.f32 %v1661, %v1612
        %v1710 = vadd.f32 %v1662, %v1613
        %v1711 = vadd.f32 %v1663, %v1614
        %v1712 = vadd.f32 %v1664, %v1615
        %v1713 = vadd.f32 %v1665, %v1616
        %v1714 = vadd.f32 %v1666, %v1617
        %v1715 = vadd.f32 %v1667, %v1618
        %v1716 = vadd.f32 %v1668, %v1619
        %v1717 = vadd.f32 %v1669, %v1620
        %v1718 = vadd.f32 %v1670, %v1621
        %v1719 = vadd.f32 %v1671, %v1622
        %v1720 = vadd.f32 %v1672, %v1623
        %v1721 = vadd.f32 %v1673, %v1624
        %v1722 = vadd.f32 %v1674, %v1625
        %v1723 = vadd.f32 %v1675, %v1626
        %v1724 = vadd.f32 %v1676, %v1627
        %v1725 = vadd.f32 %v1677, %v1628
        %v1726 = vadd.f32 %v1678, %v1629
        %v1727 = vadd.f32 %v1679, %v1630
        %v1728 = vadd.f32 %v1680, %v1631
        %v1729 = vadd.f32 %v1681, %v1632
        %v1730 = vadd.f32 %v1682, %v1633
        %1731 = vst [vmem:[%s1634] sm:$0xff] %v1683
        %1732 = vst [vmem:[%s1634 + $0x8] sm:$0xff] %v1684
        %1733 = vst [vmem:[%s1634 + $0x10] sm:$0xff] %v1685
        %1734 = vst [vmem:[%s1634 + $0x18] sm:$0xff] %v1686
        %1735 = vst [vmem:[%s1634 + $0x20] sm:$0xff] %v1687
        %1736 = vst [vmem:[%s1634 + $0x28] sm:$0xff] %v1688
        %1737 = vst [vmem:[%s1634 + $0x30] sm:$0xff] %v1689
        %1738 = vst [vmem:[%s1634 + $0x38] sm:$0xff] %v1690
        %1739 = vst [vmem:[%s1634 + $0x40] sm:$0xff] %v1691
        %1740 = vst [vmem:[%s1634 + $0x48] sm:$0xff] %v1692
        %1741 = vst [vmem:[%s1634 + $0x50] sm:$0xff] %v1693
        %1742 = vst [vmem:[%s1634 + $0x58] sm:$0xff] %v1694
        %1743 = vst [vmem:[%s1634 + $0x60] sm:$0xff] %v1695
        %1744 = vst [vmem:[%s1634 + $0x68] sm:$0xff] %v1696
        %1745 = vst [vmem:[%s1634 + $0x70] sm:$0xff] %v1697
        %1746 = vst [vmem:[%s1634 + $0x78] sm:$0xff] %v1698
        %1747 = vst [vmem:[%s1634 + $0x80] sm:$0xff] %v1699
        %1748 = vst [vmem:[%s1634 + $0x88] sm:$0xff] %v1700
        %1749 = vst [vmem:[%s1634 + $0x90] sm:$0xff] %v1701
        %1750 = vst [vmem:[%s1634 + $0x98] sm:$0xff] %v1702
        %1751 = vst [vmem:[%s1634 + $0xa0] sm:$0xff] %v1703
        %1752 = vst [vmem:[%s1634 + $0xa8] sm:$0xff] %v1704
        %1753 = vst [vmem:[%s1634 + $0xb0] sm:$0xff] %v1705
        %1754 = vst [vmem:[%s1634 + $0xb8] sm:$0xff] %v1706
        %1755 = vst [vmem:[%s1634 + $0xc0] sm:$0xff] %v1707
        %1756 = vst [vmem:[%s1634 + $0xc8] sm:$0xff] %v1708
        %1757 = vst [vmem:[%s1634 + $0xd0] sm:$0xff] %v1709
        %1758 = vst [vmem:[%s1634 + $0xd8] sm:$0xff] %v1710
        %1759 = vst [vmem:[%s1634 + $0xe0] sm:$0xff] %v1711
        %1760 = vst [vmem:[%s1634 + $0xe8] sm:$0xff] %v1712
        %1761 = vst [vmem:[%s1634 + $0xf0] sm:$0xff] %v1713
        %1762 = vst [vmem:[%s1634 + $0xf8] sm:$0xff] %v1714
        %1763 = vst [vmem:[%s1634 + $0x100] sm:$0xff] %v1715
        %1764 = vst [vmem:[%s1634 + $0x108] sm:$0xff] %v1716
        %1765 = vst [vmem:[%s1634 + $0x110] sm:$0xff] %v1717
        %1766 = vst [vmem:[%s1634 + $0x118] sm:$0xff] %v1718
        %1767 = vst [vmem:[%s1634 + $0x120] sm:$0xff] %v1719
        %1768 = vst [vmem:[%s1634 + $0x128] sm:$0xff] %v1720
        %1769 = vst [vmem:[%s1634 + $0x130] sm:$0xff] %v1721
        %1770 = vst [vmem:[%s1634 + $0x138] sm:$0xff] %v1722
        %1771 = vst [vmem:[%s1634 + $0x140] sm:$0xff] %v1723
        %1772 = vst [vmem:[%s1634 + $0x148] sm:$0xff] %v1724
        %1773 = vst [vmem:[%s1634 + $0x150] sm:$0xff] %v1725
        %1774 = vst [vmem:[%s1634 + $0x158] sm:$0xff] %v1726
        %1775 = vst [vmem:[%s1634 + $0x160] sm:$0xff] %v1727
        %1776 = vst [vmem:[%s1634 + $0x168] sm:$0xff] %v1728
        %1777 = vst [vmem:[%s1634 + $0x170] sm:$0xff] %v1729
        %1778 = vst [vmem:[%s1634 + $0x178] sm:$0xff] %v1730
        %v1779 = vpack.c.bf16 %v1587, %v1586
        %v1780 = vpack.c.bf16 %v1589, %v1588
        %v1781 = vpack.c.bf16 %v1591, %v1590
        %v1782 = vpack.c.bf16 %v1593, %v1592
        %v1783 = vpack.c.bf16 %v1595, %v1594
        %v1784 = vpack.c.bf16 %v1597, %v1596
        %v1785 = vpack.c.bf16 %v1599, %v1598
        %v1786 = vpack.c.bf16 %v1601, %v1600
        %v1787 = vpack.c.bf16 %v1603, %v1602
        %v1788 = vpack.c.bf16 %v1605, %v1604
        %v1789 = vpack.c.bf16 %v1607, %v1606
        %v1790 = vpack.c.bf16 %v1609, %v1608
        %v1791 = vpack.c.bf16 %v1611, %v1610
        %v1792 = vpack.c.bf16 %v1613, %v1612
        %v1793 = vpack.c.bf16 %v1615, %v1614
        %v1794 = vpack.c.bf16 %v1617, %v1616
        %v1795 = vpack.c.bf16 %v1619, %v1618
        %v1796 = vpack.c.bf16 %v1621, %v1620
        %v1797 = vpack.c.bf16 %v1623, %v1622
        %v1798 = vpack.c.bf16 %v1625, %v1624
        %v1799 = vpack.c.bf16 %v1627, %v1626
        %v1800 = vpack.c.bf16 %v1629, %v1628
        %v1801 = vpack.c.bf16 %v1631, %v1630
        %v1802 = vpack.c.bf16 %v1633, %v1632
        %s1803 = sshra.s32 %s253, 4
        %s1804 = sand.u32 %s253, 15
        %s1805 = smul.u32 %s267, 24
        %s1806 = sadd.s32 %s1803, %s1805
        %s1807 = smul.addr %s1806, 8
        %s1808 = scalar_lea.vmem [#allocation2], %s1807
        %1809 = vst [vmem:[%s1808] sm:$0xff] %v1779
        %1810 = vst [vmem:[%s1808 + $0x8] sm:$0xff] %v1780
        %1811 = vst [vmem:[%s1808 + $0x10] sm:$0xff] %v1781
        %1812 = vst [vmem:[%s1808 + $0x18] sm:$0xff] %v1782
        %1813 = vst [vmem:[%s1808 + $0x20] sm:$0xff] %v1783
        %1814 = vst [vmem:[%s1808 + $0x28] sm:$0xff] %v1784
        %1815 = vst [vmem:[%s1808 + $0x30] sm:$0xff] %v1785
        %1816 = vst [vmem:[%s1808 + $0x38] sm:$0xff] %v1786
        %1817 = vst [vmem:[%s1808 + $0x40] sm:$0xff] %v1787
        %1818 = vst [vmem:[%s1808 + $0x48] sm:$0xff] %v1788
        %1819 = vst [vmem:[%s1808 + $0x50] sm:$0xff] %v1789
        %1820 = vst [vmem:[%s1808 + $0x58] sm:$0xff] %v1790
        %1821 = vst [vmem:[%s1808 + $0x60] sm:$0xff] %v1791
        %1822 = vst [vmem:[%s1808 + $0x68] sm:$0xff] %v1792
        %1823 = vst [vmem:[%s1808 + $0x70] sm:$0xff] %v1793
        %1824 = vst [vmem:[%s1808 + $0x78] sm:$0xff] %v1794
        %1825 = vst [vmem:[%s1808 + $0x80] sm:$0xff] %v1795
        %1826 = vst [vmem:[%s1808 + $0x88] sm:$0xff] %v1796
        %1827 = vst [vmem:[%s1808 + $0x90] sm:$0xff] %v1797
        %1828 = vst [vmem:[%s1808 + $0x98] sm:$0xff] %v1798
        %1829 = vst [vmem:[%s1808 + $0xa0] sm:$0xff] %v1799
        %1830 = vst [vmem:[%s1808 + $0xa8] sm:$0xff] %v1800
        %1831 = vst [vmem:[%s1808 + $0xb0] sm:$0xff] %v1801
        %1832 = vst [vmem:[%s1808 + $0xb8] sm:$0xff] %v1802
      $region44: #{hyperconv_forward.1} parent=27 // pred_fallthru
        _
      %p1833 = scmp.eq.s32.totalorder %s18, 2
      %p1834 = pnand %p1383, %p1833
      %p1835 = pneg %p1834
      // Predicated region
      $region45: #{hyperconv_forward.1} parent=27 // pred_check
        _
      $region46: #{hyperconv_forward.1} parent=27 // pred_check_branch
        %1837 = sbr.rel (%p1834) target = $region48
      $region47: #{hyperconv_forward.1} parent=27 // pred_region
        %s1838 = scalar_lea.vmem [#allocation3], %s253
        %v1839 = vld [vmem:[%s1838] sm:$0xff]
        %v1840 = vld [vmem:[%s1838 + $0x8] sm:$0xff]
        %v1841 = vld [vmem:[%s1838 + $0x10] sm:$0xff]
        %v1842 = vld [vmem:[%s1838 + $0x18] sm:$0xff]
        %v1843 = vld [vmem:[%s1838 + $0x20] sm:$0xff]
        %v1844 = vld [vmem:[%s1838 + $0x28] sm:$0xff]
        %v1845 = vld [vmem:[%s1838 + $0x30] sm:$0xff]
        %v1846 = vld [vmem:[%s1838 + $0x38] sm:$0xff]
        %v1847 = vld [vmem:[%s1838 + $0x40] sm:$0xff]
        %v1848 = vld [vmem:[%s1838 + $0x48] sm:$0xff]
        %v1849 = vld [vmem:[%s1838 + $0x50] sm:$0xff]
        %v1850 = vld [vmem:[%s1838 + $0x58] sm:$0xff]
        %v1851 = vld [vmem:[%s1838 + $0x60] sm:$0xff]
        %v1852 = vld [vmem:[%s1838 + $0x68] sm:$0xff]
        %v1853 = vld [vmem:[%s1838 + $0x70] sm:$0xff]
        %v1854 = vld [vmem:[%s1838 + $0x78] sm:$0xff]
        %v1855 = vld [vmem:[%s1838 + $0x80] sm:$0xff]
        %v1856 = vld [vmem:[%s1838 + $0x88] sm:$0xff]
        %v1857 = vld [vmem:[%s1838 + $0x90] sm:$0xff]
        %v1858 = vld [vmem:[%s1838 + $0x98] sm:$0xff]
        %v1859 = vld [vmem:[%s1838 + $0xa0] sm:$0xff]
        %v1860 = vld [vmem:[%s1838 + $0xa8] sm:$0xff]
        %v1861 = vld [vmem:[%s1838 + $0xb0] sm:$0xff]
        %v1862 = vld [vmem:[%s1838 + $0xb8] sm:$0xff]
        %v1863 = vld [vmem:[%s1838 + $0xc0] sm:$0xff]
        %v1864 = vld [vmem:[%s1838 + $0xc8] sm:$0xff]
        %v1865 = vld [vmem:[%s1838 + $0xd0] sm:$0xff]
        %v1866 = vld [vmem:[%s1838 + $0xd8] sm:$0xff]
        %v1867 = vld [vmem:[%s1838 + $0xe0] sm:$0xff]
        %v1868 = vld [vmem:[%s1838 + $0xe8] sm:$0xff]
        %v1869 = vld [vmem:[%s1838 + $0xf0] sm:$0xff]
        %v1870 = vld [vmem:[%s1838 + $0xf8] sm:$0xff]
        %v1871 = vld [vmem:[%s1838 + $0x100] sm:$0xff]
        %v1872 = vld [vmem:[%s1838 + $0x108] sm:$0xff]
        %v1873 = vld [vmem:[%s1838 + $0x110] sm:$0xff]
        %v1874 = vld [vmem:[%s1838 + $0x118] sm:$0xff]
        %v1875 = vld [vmem:[%s1838 + $0x120] sm:$0xff]
        %v1876 = vld [vmem:[%s1838 + $0x128] sm:$0xff]
        %v1877 = vld [vmem:[%s1838 + $0x130] sm:$0xff]
        %v1878 = vld [vmem:[%s1838 + $0x138] sm:$0xff]
        %v1879 = vld [vmem:[%s1838 + $0x140] sm:$0xff]
        %v1880 = vld [vmem:[%s1838 + $0x148] sm:$0xff]
        %v1881 = vld [vmem:[%s1838 + $0x150] sm:$0xff]
        %v1882 = vld [vmem:[%s1838 + $0x158] sm:$0xff]
        %v1883 = vld [vmem:[%s1838 + $0x160] sm:$0xff]
        %v1884 = vld [vmem:[%s1838 + $0x168] sm:$0xff]
        %v1885 = vld [vmem:[%s1838 + $0x170] sm:$0xff]
        %v1886 = vld [vmem:[%s1838 + $0x178] sm:$0xff]
        %1887 = vst [vmem:[%s248] sm:$0xff] %v1839
        %1888 = vst [vmem:[%s248 + $0x8] sm:$0xff] %v1840
        %1889 = vst [vmem:[%s248 + $0x10] sm:$0xff] %v1841
        %1890 = vst [vmem:[%s248 + $0x18] sm:$0xff] %v1842
        %1891 = vst [vmem:[%s248 + $0x20] sm:$0xff] %v1843
        %1892 = vst [vmem:[%s248 + $0x28] sm:$0xff] %v1844
        %1893 = vst [vmem:[%s248 + $0x30] sm:$0xff] %v1845
        %1894 = vst [vmem:[%s248 + $0x38] sm:$0xff] %v1846
        %1895 = vst [vmem:[%s248 + $0x40] sm:$0xff] %v1847
        %1896 = vst [vmem:[%s248 + $0x48] sm:$0xff] %v1848
        %1897 = vst [vmem:[%s248 + $0x50] sm:$0xff] %v1849
        %1898 = vst [vmem:[%s248 + $0x58] sm:$0xff] %v1850
        %1899 = vst [vmem:[%s248 + $0x60] sm:$0xff] %v1851
        %1900 = vst [vmem:[%s248 + $0x68] sm:$0xff] %v1852
        %1901 = vst [vmem:[%s248 + $0x70] sm:$0xff] %v1853
        %1902 = vst [vmem:[%s248 + $0x78] sm:$0xff] %v1854
        %1903 = vst [vmem:[%s248 + $0x80] sm:$0xff] %v1855
        %1904 = vst [vmem:[%s248 + $0x88] sm:$0xff] %v1856
        %1905 = vst [vmem:[%s248 + $0x90] sm:$0xff] %v1857
        %1906 = vst [vmem:[%s248 + $0x98] sm:$0xff] %v1858
        %1907 = vst [vmem:[%s248 + $0xa0] sm:$0xff] %v1859
        %1908 = vst [vmem:[%s248 + $0xa8] sm:$0xff] %v1860
        %1909 = vst [vmem:[%s248 + $0xb0] sm:$0xff] %v1861
        %1910 = vst [vmem:[%s248 + $0xb8] sm:$0xff] %v1862
        %1911 = vst [vmem:[%s248 + $0xc0] sm:$0xff] %v1863
        %1912 = vst [vmem:[%s248 + $0xc8] sm:$0xff] %v1864
        %1913 = vst [vmem:[%s248 + $0xd0] sm:$0xff] %v1865
        %1914 = vst [vmem:[%s248 + $0xd8] sm:$0xff] %v1866
        %1915 = vst [vmem:[%s248 + $0xe0] sm:$0xff] %v1867
        %1916 = vst [vmem:[%s248 + $0xe8] sm:$0xff] %v1868
        %1917 = vst [vmem:[%s248 + $0xf0] sm:$0xff] %v1869
        %1918 = vst [vmem:[%s248 + $0xf8] sm:$0xff] %v1870
        %1919 = vst [vmem:[%s248 + $0x100] sm:$0xff] %v1871
        %1920 = vst [vmem:[%s248 + $0x108] sm:$0xff] %v1872
        %1921 = vst [vmem:[%s248 + $0x110] sm:$0xff] %v1873
        %1922 = vst [vmem:[%s248 + $0x118] sm:$0xff] %v1874
        %1923 = vst [vmem:[%s248 + $0x120] sm:$0xff] %v1875
        %1924 = vst [vmem:[%s248 + $0x128] sm:$0xff] %v1876
        %1925 = vst [vmem:[%s248 + $0x130] sm:$0xff] %v1877
        %1926 = vst [vmem:[%s248 + $0x138] sm:$0xff] %v1878
        %1927 = vst [vmem:[%s248 + $0x140] sm:$0xff] %v1879
        %1928 = vst [vmem:[%s248 + $0x148] sm:$0xff] %v1880
        %1929 = vst [vmem:[%s248 + $0x150] sm:$0xff] %v1881
        %1930 = vst [vmem:[%s248 + $0x158] sm:$0xff] %v1882
        %1931 = vst [vmem:[%s248 + $0x160] sm:$0xff] %v1883
        %1932 = vst [vmem:[%s248 + $0x168] sm:$0xff] %v1884
        %1933 = vst [vmem:[%s248 + $0x170] sm:$0xff] %v1885
        %1934 = vst [vmem:[%s248 + $0x178] sm:$0xff] %v1886
      $region48: #{hyperconv_forward.1} parent=27 // pred_fallthru
        _
      %p1935 = scmp.eq.s32.totalorder %s18, 2
      %s1936 = scalar_select %p1935, %s19, 0
      %s1937 = smul.u32 48, %s1936
      %p1938 = scmp.lt.s32.totalorder %s1937, 47
      %s1939 = scalar_select %p1938, %s1937, 47
      %s1940 = smul.addr %s1939, 8
      %s1941 = scalar_lea.vmem %s2, %s1940
      // Predicated region
      $region49: #{hyperconv_forward.1} parent=27 // pred_check
        %p1942 = pneg %p118
      $region50: #{hyperconv_forward.1} parent=27 // pred_check_branch
        %1944 = sbr.rel (%p1942) target = $region52
      $region51: #{hyperconv_forward.1} parent=27 // pred_region
        %p1945 = scmp.eq.s32.totalorder %s18, 2
        %s1946 = scalar_select %p1945, %s19, 0
        %s1947 = smul.u32 48, %s1946
      $region52: #{hyperconv_forward.1} parent=27 // pred_fallthru
        _
    $region28: #{hyperconv_forward.1} parent=5 // pred_fallthru
      _
    %p1948 = scmp.le.s32.totalorder 2, %s8
    // Predicated region
    $region53: #{hyperconv_forward.1} parent=5 // pred_check
      %p1949 = pneg %p1948
    $region54: #{hyperconv_forward.1} parent=5 // pred_check_branch
      %1951 = sbr.rel (%p1949) target = $region56
    $region55: #{hyperconv_forward.1} parent=5 // pred_region
      %s1952 = ssub.s32 %s8, 2
      // Predicated region
      $region57: #{hyperconv_forward.1} parent=55 // pred_check
        %p1953 = pneg %p124
      $region58: #{hyperconv_forward.1} parent=55 // pred_check_branch
        %1955 = sbr.rel (%p1953) target = $region60
      $region59: #{hyperconv_forward.1} parent=55 // pred_region
        %p1956 = scmp.eq.s32.totalorder %s21, 2
        %s1957 = scalar_select %p1956, %s22, 0
        %s1958 = smul.u32 48, %s1957
        %p1959 = scmp.lt.s32.totalorder %s1958, 47
        %s1960 = scalar_select %p1959, %s1958, 47
        %s1961 = smul.addr %s1960, 8
        %s1962 = scalar_lea.vmem %s2, %s1961
      $region60: #{hyperconv_forward.1} parent=55 // pred_fallthru
        _
    $region56: #{hyperconv_forward.1} parent=5 // pred_fallthru
      _
  $region6: #{hyperconv_forward.1} parent=0 // loop_footer
    %s12 = sadd.s32 1, %s8
  $region7: #{hyperconv_forward.1} parent=0 // loop_footer_branch
    %7 = sbr.rel target = $region3
  $region8: #{hyperconv_forward.1} parent=0 // loop_exit
    _

</llo_original>
